<compile_context>
chip_gen: v6e
topology: v6e:2x2x1
jax: 0.10.0
libtpu: 0.0.40
codegen_flags: <defaults>
</compile_context>

<pallas_src>
import jax
import jax.numpy as jnp
from jax import lax
from jax.experimental import pallas as pl
from jax.experimental.pallas import tpu as pltpu


def bottleneck_kernel(x_ref, w1_ref, b1_ref, w2_ref, b2_ref, w3_ref, b3_ref, o_ref):
    # x_ref : (1, H+2, W, Cin) f32   (H zero-padded by 1 row each side)
    # w1_ref: (Cin, width)      bf16   b1_ref: (1, width) f32
    # w2_ref: (9*width, width)  bf16   b2_ref: (1, width) f32
    # w3_ref: (width, Cout)     bf16   b3_ref: (1, Cout)  f32
    # o_ref : (1, TH, W, Cout)  f32
    _, Hp, W, Cin = x_ref.shape
    H = Hp - 2
    width = w1_ref.shape[1]
    _, TH, _, Cout = o_ref.shape

    r = pl.program_id(1)
    row0 = pl.multiple_of(r * TH, TH)       # start row (padded coords) of the halo slab

    # ---- conv1 (1x1, BN folded) + relu over TH+2 halo rows ----
    xs = x_ref[0, pl.ds(row0, TH + 2), :, :]                        # (TH+2, W, Cin) f32
    h1 = jnp.dot(xs.reshape((TH + 2) * W, Cin).astype(jnp.bfloat16),
                 w1_ref[...], preferred_element_type=jnp.float32)   # (., width) f32
    h1 = jnp.maximum(h1 + b1_ref[...], 0.0).reshape(TH + 2, W, width)
    # zero halo rows outside the true image (padded rows 0 and H+1)
    prow = row0 + lax.broadcasted_iota(jnp.int32, (TH + 2, 1, 1), 0)
    h1 = jnp.where((prow >= 1) & (prow <= H), h1, 0.0).astype(jnp.bfloat16)

    # ---- conv2 (3x3, stride=1, pad=1, BN folded) as one im2col matmul + relu ----
    zcol = jnp.zeros((TH + 2, 1, width), jnp.bfloat16)
    h1p = jnp.concatenate([zcol, h1, zcol], axis=1)                 # (TH+2, W+2, width)
    cols = [h1p[dy:dy + TH, dx:dx + W, :].reshape(TH * W, width)
            for dy in range(3) for dx in range(3)]
    h1cat = jnp.concatenate(cols, axis=-1)                          # (TH*W, 9*width) bf16
    h2 = jnp.dot(h1cat, w2_ref[...], preferred_element_type=jnp.float32)
    h2 = jnp.maximum(h2 + b2_ref[...], 0.0).astype(jnp.bfloat16)    # (TH*W, width)

    # ---- conv3 (1x1, BN folded) + residual add + relu ----
    h3 = jnp.dot(h2, w3_ref[...], preferred_element_type=jnp.float32)
    h3 = h3 + b3_ref[...]
    # identity branch (Cin == Cout, downsample=None): re-read x rows for this tile
    xr = x_ref[0, pl.ds(row0 + 1, TH), :, :].reshape(TH * W, Cin)
    out = jnp.maximum(h3 + xr, 0.0)
    o_ref[0] = out.reshape(TH, W, Cout).astype(o_ref.dtype)


def _vmem_limit_bytes(H, W, Cin, Cout, width, TH):
    f32, bf16 = 4, 2
    x_blk = (H + 2) * W * Cin * f32
    o_blk = TH * W * Cout * f32
    wts = (Cin * width + 9 * width * width + width * Cout) * bf16 + (2 * width + Cout) * f32
    tmp = ((TH + 2) * W * width * (f32 + bf16)           # h1 (f32 + bf16 copies)
           + (TH + 2) * (W + 2) * width * bf16           # padded h1
           + TH * W * 9 * width * bf16 * 2               # im2col slab (+ slack)
           + TH * W * width * (f32 + bf16)               # h2
           + TH * W * Cout * f32 * 2)                    # h3 / out
    est = 2 * (x_blk + o_blk + wts) + tmp                # double-buffered blocks + temps
    return int(min(64 * 1024 * 1024, max(32 * 1024 * 1024, 2 * est)))


def bottleneck_forward(x_nchw, w1, s1, b1, w2, s2, b2, w3, s3, b3, *, row_tile=None):
    """x_nchw: (N, Cin, H, W) float32 (PyTorch layout). Returns NCHW float32."""
    x = jnp.transpose(x_nchw, (0, 2, 3, 1))              # -> NHWC
    N, H, W, Cin = x.shape
    width = w1.shape[1]
    Cout = w3.shape[1]

    if row_tile is None:
        row_tile = next(t for t in (64, 32, 16, 8, 4, 2, 1) if H % t == 0)
    TH = row_tile
    assert H % TH == 0, "row_tile must divide H"

    # Fold BN scales into conv weights (per output channel); weights in bf16, biases in f32.
    w1f = (w1 * s1).astype(jnp.bfloat16)                             # (Cin, width)
    w2f = (w2 * s2).reshape(9 * width, width).astype(jnp.bfloat16)   # (9*width, width)
    w3f = (w3 * s3).astype(jnp.bfloat16)                             # (width, Cout)
    b1f = b1.astype(jnp.float32)
    b2f = b2.astype(jnp.float32)
    b3f = b3.astype(jnp.float32)

    # zero-pad H by one row on each side for the 3x3 halo
    xp = jnp.pad(x, ((0, 0), (1, 1), (0, 0), (0, 0)))                # (N, H+2, W, Cin)

    full2 = lambda b, r: (0, 0)
    out = pl.pallas_call(
        bottleneck_kernel,
        out_shape=jax.ShapeDtypeStruct((N, H, W, Cout), jnp.float32),
        grid_spec=pltpu.PrefetchScalarGridSpec(
            num_scalar_prefetch=0,
            grid=(N, H // TH),
            in_specs=[
                pl.BlockSpec((1, H + 2, W, Cin), lambda b, r: (b, 0, 0, 0)),
                pl.BlockSpec((Cin, width), full2),
                pl.BlockSpec((1, width), full2),
                pl.BlockSpec((9 * width, width), full2),
                pl.BlockSpec((1, width), full2),
                pl.BlockSpec((width, Cout), full2),
                pl.BlockSpec((1, Cout), full2),
            ],
            out_specs=pl.BlockSpec((1, TH, W, Cout), lambda b, r: (b, r, 0, 0)),
        ),
        compiler_params=pltpu.CompilerParams(
            dimension_semantics=("parallel", "parallel"),
            vmem_limit_bytes=_vmem_limit_bytes(H, W, Cin, Cout, width, TH),
        ),
    )(xp, w1f, b1f, w2f, b2f, w3f, b3f)
    return jnp.transpose(out, (0, 3, 1, 2))              # back to NCHW


def ref_forward(x_nchw, w1, s1, b1, w2, s2, b2, w3, s3, b3):
    """Pure-JAX f32 reference (exact module semantics) for validation."""
    x = jnp.transpose(x_nchw, (0, 2, 3, 1))
    width = w1.shape[1]
    h = jnp.einsum("nhwc,cd->nhwd", x, w1)
    h = jnp.maximum(h * s1[0] + b1[0], 0.0)
    w2_hwio = w2.reshape(3, 3, width, width)
    h = lax.conv_general_dilated(h, w2_hwio, (1, 1), "SAME",
                                 dimension_numbers=("NHWC", "HWIO", "NHWC"))
    h = jnp.maximum(h * s2[0] + b2[0], 0.0)
    h = jnp.einsum("nhwc,cd->nhwd", h, w3)
    h = h * s3[0] + b3[0]
    out = jnp.maximum(h + x, 0.0)
    return jnp.transpose(out, (0, 3, 1, 2))


def _folded_bn(kg, kb, km, kv, C, eps=1e-5):
    gamma = jax.random.normal(kg, (C,), jnp.float32) * 0.1 + 1.0
    beta = jax.random.normal(kb, (C,), jnp.float32) * 0.1
    mean = jax.random.normal(km, (C,), jnp.float32) * 0.1
    var = jax.random.uniform(kv, (C,), jnp.float32, minval=0.5, maxval=1.5)
    scale = gamma / jnp.sqrt(var + eps)
    bias = beta - mean * scale
    return scale.reshape(1, C), bias.reshape(1, C)


if __name__ == "__main__":
    key = jax.random.PRNGKey(0)
    N, H, W = 2, 16, 16
    inplanes, planes = 16, 4          # expansion=4 -> out channels = 16 = inplanes
    width = planes                    # int(planes * 64/64) * 1
    Cout = planes * 4

    ks = jax.random.split(key, 16)
    x = jax.random.normal(ks[0], (N, inplanes, H, W), jnp.float32)     # NCHW input
    w1 = jax.random.normal(ks[1], (inplanes, width), jnp.float32) * 0.1
    w2 = jax.random.normal(ks[2], (9, width, width), jnp.float32) * 0.1
    w3 = jax.random.normal(ks[3], (width, Cout), jnp.float32) * 0.1
    s1, b1 = _folded_bn(ks[4], ks[5], ks[6], ks[7], width)
    s2, b2 = _folded_bn(ks[8], ks[9], ks[10], ks[11], width)
    s3, b3 = _folded_bn(ks[12], ks[13], ks[14], ks[15], Cout)

    out = bottleneck_forward(x, w1, s1, b1, w2, s2, b2, w3, s3, b3, row_tile=8)
    out = jax.block_until_ready(out)

    ref = ref_forward(x, w1, s1, b1, w2, s2, b2, w3, s3, b3)
    assert out.shape == (N, inplanes, H, W)
    # bf16 matmul operands vs f32 reference -> loosened tolerance
    assert jnp.allclose(out, ref, atol=2e-2, rtol=2e-2), "mismatch vs JAX reference"
    print("KERNEL_OK")
</pallas_src>

<mosaic_0001>
module attributes {stable_mosaic.version = 11 : i64} {
  func.func @bottleneck_kernel(%arg0: i32, %arg1: i32, %arg2: memref<1x18x16x16xf32, #tpu.memory_space<vmem>>, %arg3: memref<16x4xbf16, #tpu.memory_space<vmem>>, %arg4: memref<1x4xf32, #tpu.memory_space<vmem>>, %arg5: memref<36x4xbf16, #tpu.memory_space<vmem>>, %arg6: memref<1x4xf32, #tpu.memory_space<vmem>>, %arg7: memref<4x16xbf16, #tpu.memory_space<vmem>>, %arg8: memref<1x16xf32, #tpu.memory_space<vmem>>, %arg9: memref<1x8x16x16xf32, #tpu.memory_space<vmem>>) attributes {dimension_semantics = [#tpu.dimension_semantics<parallel>, #tpu.dimension_semantics<parallel>], iteration_bounds = array<i64: 2, 2>, scalar_prefetch = 0 : i64, scratch_operands = 0 : i64, tpu.core_type = #tpu.core_type<tc>, window_params = [{transform_indices = @transform_0, window_bounds = array<i64: 1, 18, 16, 16>}, {pipeline_mode = #tpu.pipeline_mode<synchronous>, transform_indices = @transform_1, window_bounds = array<i64: 16, 4>}, {pipeline_mode = #tpu.pipeline_mode<synchronous>, transform_indices = @transform_2, window_bounds = array<i64: 1, 4>}, {pipeline_mode = #tpu.pipeline_mode<synchronous>, transform_indices = @transform_3, window_bounds = array<i64: 36, 4>}, {pipeline_mode = #tpu.pipeline_mode<synchronous>, transform_indices = @transform_4, window_bounds = array<i64: 1, 4>}, {pipeline_mode = #tpu.pipeline_mode<synchronous>, transform_indices = @transform_5, window_bounds = array<i64: 4, 16>}, {pipeline_mode = #tpu.pipeline_mode<synchronous>, transform_indices = @transform_6, window_bounds = array<i64: 1, 16>}, {transform_indices = @transform_7, window_bounds = array<i64: 1, 8, 16, 16>}]} {
    %c8_i32 = arith.constant 8 : i32
    %0 = arith.muli %arg1, %c8_i32 : i32
    %1 = tpu.assume_multiple %0, 8 : i32
    %c0 = arith.constant 0 : index
    %2 = arith.index_cast %1 : i32 to index
    %c0_0 = arith.constant 0 : index
    %c0_1 = arith.constant 0 : index
    %3 = vector.load %arg2[%c0, %2, %c0_0, %c0_1] : memref<1x18x16x16xf32, #tpu.memory_space<vmem>>, vector<1x10x16x16xf32>
    %4 = vector.shape_cast %3 : vector<1x10x16x16xf32> to vector<10x16x16xf32>
    %5 = vector.shape_cast %4 : vector<10x16x16xf32> to vector<160x16xf32>
    %6 = arith.truncf %5 : vector<160x16xf32> to vector<160x16xbf16>
    %c0_2 = arith.constant 0 : index
    %c0_3 = arith.constant 0 : index
    %7 = vector.load %arg3[%c0_2, %c0_3] : memref<16x4xbf16, #tpu.memory_space<vmem>>, vector<16x4xbf16>
    %cst = arith.constant dense<0.000000e+00> : vector<160x4xf32>
    %8 = tpu.matmul %6, %7, %cst {dimension_numbers = #tpu.dot_dimension_numbers<[1], [0], [0], [1], [0, 0, 1, 1], [], []>} : vector<160x16xbf16>, vector<16x4xbf16>, vector<160x4xf32> -> vector<160x4xf32>
    %c0_4 = arith.constant 0 : index
    %c0_5 = arith.constant 0 : index
    %9 = vector.load %arg4[%c0_4, %c0_5] : memref<1x4xf32, #tpu.memory_space<vmem>>, vector<1x4xf32>
    %10 = vector.broadcast %9 : vector<1x4xf32> to vector<160x4xf32>
    %11 = arith.addf %8, %10 : vector<160x4xf32>
    %cst_6 = arith.constant 0.000000e+00 : f32
    %12 = vector.broadcast %cst_6 : f32 to vector<160x4xf32>
    %13 = arith.maximumf %11, %12 : vector<160x4xf32>
    %14 = vector.shape_cast %13 : vector<160x4xf32> to vector<10x16x4xf32>
    %15 = tpu.iota {dimensions = array<i32: 0>} : vector<10x1x1xi32>
    %16 = vector.broadcast %1 : i32 to vector<10x1x1xi32>
    %17 = arith.addi %16, %15 : vector<10x1x1xi32>
    %c1_i32 = arith.constant 1 : i32
    %18 = vector.broadcast %c1_i32 : i32 to vector<10x1x1xi32>
    %19 = arith.cmpi sge, %17, %18 : vector<10x1x1xi32>
    %c16_i32 = arith.constant 16 : i32
    %20 = vector.broadcast %c16_i32 : i32 to vector<10x1x1xi32>
    %21 = arith.cmpi sle, %17, %20 : vector<10x1x1xi32>
    %22 = arith.andi %19, %21 : vector<10x1x1xi1>
    %cst_7 = arith.constant 0.000000e+00 : f32
    %23 = vector.shape_cast %22 : vector<10x1x1xi1> to vector<10x1x1xi1>
    %24 = vector.broadcast %23 : vector<10x1x1xi1> to vector<10x16x4xi1>
    %25 = vector.broadcast %cst_7 : f32 to vector<10x16x4xf32>
    %26 = arith.select %24, %14, %25 : vector<10x16x4xi1>, vector<10x16x4xf32>
    %27 = arith.truncf %26 : vector<10x16x4xf32> to vector<10x16x4xbf16>
    %cst_8 = arith.constant 0.000000e+00 : bf16
    %28 = vector.broadcast %cst_8 : bf16 to vector<10x1x4xbf16>
    %29 = tpu.concatenate %28, %27, %28 in 1 : vector<10x1x4xbf16>, vector<10x16x4xbf16>, vector<10x1x4xbf16> -> vector<10x18x4xbf16>
    %30 = vector.extract_strided_slice %29 {offsets = [0, 0, 0], sizes = [8, 16, 4], strides = [1, 1, 1]} : vector<10x18x4xbf16> to vector<8x16x4xbf16>
    %31 = vector.shape_cast %30 : vector<8x16x4xbf16> to vector<128x4xbf16>
    %32 = vector.extract_strided_slice %29 {offsets = [0, 1, 0], sizes = [8, 16, 4], strides = [1, 1, 1]} : vector<10x18x4xbf16> to vector<8x16x4xbf16>
    %33 = vector.shape_cast %32 : vector<8x16x4xbf16> to vector<128x4xbf16>
    %34 = vector.extract_strided_slice %29 {offsets = [0, 2, 0], sizes = [8, 16, 4], strides = [1, 1, 1]} : vector<10x18x4xbf16> to vector<8x16x4xbf16>
    %35 = vector.shape_cast %34 : vector<8x16x4xbf16> to vector<128x4xbf16>
    %36 = vector.extract_strided_slice %29 {offsets = [1, 0, 0], sizes = [8, 16, 4], strides = [1, 1, 1]} : vector<10x18x4xbf16> to vector<8x16x4xbf16>
    %37 = vector.shape_cast %36 : vector<8x16x4xbf16> to vector<128x4xbf16>
    %38 = vector.extract_strided_slice %29 {offsets = [1, 1, 0], sizes = [8, 16, 4], strides = [1, 1, 1]} : vector<10x18x4xbf16> to vector<8x16x4xbf16>
    %39 = vector.shape_cast %38 : vector<8x16x4xbf16> to vector<128x4xbf16>
    %40 = vector.extract_strided_slice %29 {offsets = [1, 2, 0], sizes = [8, 16, 4], strides = [1, 1, 1]} : vector<10x18x4xbf16> to vector<8x16x4xbf16>
    %41 = vector.shape_cast %40 : vector<8x16x4xbf16> to vector<128x4xbf16>
    %42 = vector.extract_strided_slice %29 {offsets = [2, 0, 0], sizes = [8, 16, 4], strides = [1, 1, 1]} : vector<10x18x4xbf16> to vector<8x16x4xbf16>
    %43 = vector.shape_cast %42 : vector<8x16x4xbf16> to vector<128x4xbf16>
    %44 = vector.extract_strided_slice %29 {offsets = [2, 1, 0], sizes = [8, 16, 4], strides = [1, 1, 1]} : vector<10x18x4xbf16> to vector<8x16x4xbf16>
    %45 = vector.shape_cast %44 : vector<8x16x4xbf16> to vector<128x4xbf16>
    %46 = vector.extract_strided_slice %29 {offsets = [2, 2, 0], sizes = [8, 16, 4], strides = [1, 1, 1]} : vector<10x18x4xbf16> to vector<8x16x4xbf16>
    %47 = vector.shape_cast %46 : vector<8x16x4xbf16> to vector<128x4xbf16>
    %48 = tpu.concatenate %31, %33, %35, %37, %39, %41, %43, %45, %47 in 1 : vector<128x4xbf16>, vector<128x4xbf16>, vector<128x4xbf16>, vector<128x4xbf16>, vector<128x4xbf16>, vector<128x4xbf16>, vector<128x4xbf16>, vector<128x4xbf16>, vector<128x4xbf16> -> vector<128x36xbf16>
    %c0_9 = arith.constant 0 : index
    %c0_10 = arith.constant 0 : index
    %49 = vector.load %arg5[%c0_9, %c0_10] : memref<36x4xbf16, #tpu.memory_space<vmem>>, vector<36x4xbf16>
    %cst_11 = arith.constant dense<0.000000e+00> : vector<128x4xf32>
    %50 = tpu.matmul %48, %49, %cst_11 {dimension_numbers = #tpu.dot_dimension_numbers<[1], [0], [0], [1], [0, 0, 1, 1], [], []>} : vector<128x36xbf16>, vector<36x4xbf16>, vector<128x4xf32> -> vector<128x4xf32>
    %c0_12 = arith.constant 0 : index
    %c0_13 = arith.constant 0 : index
    %51 = vector.load %arg6[%c0_12, %c0_13] : memref<1x4xf32, #tpu.memory_space<vmem>>, vector<1x4xf32>
    %52 = vector.broadcast %51 : vector<1x4xf32> to vector<128x4xf32>
    %53 = arith.addf %50, %52 : vector<128x4xf32>
    %cst_14 = arith.constant 0.000000e+00 : f32
    %54 = vector.broadcast %cst_14 : f32 to vector<128x4xf32>
    %55 = arith.maximumf %53, %54 : vector<128x4xf32>
    %56 = arith.truncf %55 : vector<128x4xf32> to vector<128x4xbf16>
    %c0_15 = arith.constant 0 : index
    %c0_16 = arith.constant 0 : index
    %57 = vector.load %arg7[%c0_15, %c0_16] : memref<4x16xbf16, #tpu.memory_space<vmem>>, vector<4x16xbf16>
    %cst_17 = arith.constant dense<0.000000e+00> : vector<128x16xf32>
    %58 = tpu.matmul %56, %57, %cst_17 {dimension_numbers = #tpu.dot_dimension_numbers<[1], [0], [0], [1], [0, 0, 1, 1], [], []>} : vector<128x4xbf16>, vector<4x16xbf16>, vector<128x16xf32> -> vector<128x16xf32>
    %c0_18 = arith.constant 0 : index
    %c0_19 = arith.constant 0 : index
    %59 = vector.load %arg8[%c0_18, %c0_19] : memref<1x16xf32, #tpu.memory_space<vmem>>, vector<1x16xf32>
    %60 = vector.broadcast %59 : vector<1x16xf32> to vector<128x16xf32>
    %61 = arith.addf %58, %60 : vector<128x16xf32>
    %c1_i32_20 = arith.constant 1 : i32
    %62 = arith.addi %1, %c1_i32_20 : i32
    %c0_21 = arith.constant 0 : index
    %63 = arith.index_cast %62 : i32 to index
    %c0_22 = arith.constant 0 : index
    %c0_23 = arith.constant 0 : index
    %64 = vector.load %arg2[%c0_21, %63, %c0_22, %c0_23] : memref<1x18x16x16xf32, #tpu.memory_space<vmem>>, vector<1x8x16x16xf32>
    %65 = vector.shape_cast %64 : vector<1x8x16x16xf32> to vector<8x16x16xf32>
    %66 = vector.shape_cast %65 : vector<8x16x16xf32> to vector<128x16xf32>
    %67 = arith.addf %61, %66 : vector<128x16xf32>
    %cst_24 = arith.constant 0.000000e+00 : f32
    %68 = vector.broadcast %cst_24 : f32 to vector<128x16xf32>
    %69 = arith.maximumf %67, %68 : vector<128x16xf32>
    %70 = vector.shape_cast %69 : vector<128x16xf32> to vector<8x16x16xf32>
    %c0_25 = arith.constant 0 : index
    %c0_26 = arith.constant 0 : index
    %c0_27 = arith.constant 0 : index
    %c0_28 = arith.constant 0 : index
    %71 = vector.load %arg9[%c0_25, %c0_26, %c0_27, %c0_28] : memref<1x8x16x16xf32, #tpu.memory_space<vmem>>, vector<1x8x16x16xf32>
    %72 = vector.shape_cast %71 : vector<1x8x16x16xf32> to vector<8x16x16xf32>
    %73 = vector.shape_cast %70 : vector<8x16x16xf32> to vector<1x8x16x16xf32>
    tpu.vector_store %arg9[%c0_25, %c0_26, %c0_27, %c0_28], %73 {strides = array<i32>} : memref<1x8x16x16xf32, #tpu.memory_space<vmem>>, vector<1x8x16x16xf32>,
    return
  }
  func.func @transform_0(%arg0: i32, %arg1: i32) -> (i32, i32, i32, i32) {
    %c0_i32 = arith.constant 0 : i32
    %c0_i32_0 = arith.constant 0 : i32
    %c0_i32_1 = arith.constant 0 : i32
    %c0_i32_2 = arith.constant 0 : i32
    return %arg0, %c0_i32, %c0_i32_0, %c0_i32_1 : i32, i32, i32, i32
  }
  func.func @transform_1(%arg0: i32, %arg1: i32) -> (i32, i32) {
    %c0_i32 = arith.constant 0 : i32
    %c0_i32_0 = arith.constant 0 : i32
    %c0_i32_1 = arith.constant 0 : i32
    return %c0_i32, %c0_i32_0 : i32, i32
  }
  func.func @transform_2(%arg0: i32, %arg1: i32) -> (i32, i32) {
    %c0_i32 = arith.constant 0 : i32
    %c0_i32_0 = arith.constant 0 : i32
    %c0_i32_1 = arith.constant 0 : i32
    return %c0_i32, %c0_i32_0 : i32, i32
  }
  func.func @transform_3(%arg0: i32, %arg1: i32) -> (i32, i32) {
    %c0_i32 = arith.constant 0 : i32
    %c0_i32_0 = arith.constant 0 : i32
    %c0_i32_1 = arith.constant 0 : i32
    return %c0_i32, %c0_i32_0 : i32, i32
  }
  func.func @transform_4(%arg0: i32, %arg1: i32) -> (i32, i32) {
    %c0_i32 = arith.constant 0 : i32
    %c0_i32_0 = arith.constant 0 : i32
    %c0_i32_1 = arith.constant 0 : i32
    return %c0_i32, %c0_i32_0 : i32, i32
  }
  func.func @transform_5(%arg0: i32, %arg1: i32) -> (i32, i32) {
    %c0_i32 = arith.constant 0 : i32
    %c0_i32_0 = arith.constant 0 : i32
    %c0_i32_1 = arith.constant 0 : i32
    return %c0_i32, %c0_i32_0 : i32, i32
  }
  func.func @transform_6(%arg0: i32, %arg1: i32) -> (i32, i32) {
    %c0_i32 = arith.constant 0 : i32
    %c0_i32_0 = arith.constant 0 : i32
    %c0_i32_1 = arith.constant 0 : i32
    return %c0_i32, %c0_i32_0 : i32, i32
  }
  func.func @transform_7(%arg0: i32, %arg1: i32) -> (i32, i32, i32, i32) {
    %c0_i32 = arith.constant 0 : i32
    %c0_i32_0 = arith.constant 0 : i32
    %c0_i32_1 = arith.constant 0 : i32
    return %arg0, %arg1, %c0_i32, %c0_i32_0 : i32, i32, i32, i32
  }
}

</mosaic_0001>

<llo_original>
// kernel: tpu_custom_call.1
$region0: #{tpu_custom_call.1}
  #allocation0 [shape = 'u32[]', space=smem, size = 0x4, offset = 0x4, fixed_abs, tag = 'smem constant byte address 0x4 - core index']
  #allocation1 [shape = 'u32[144,128]{1,0:T(1,128)}', space=vmem, size = 0x12000, scoped, tag = 'internal scratch']
  %s0 = inlined_call_operand.vmem [shape: f32[2,18,16,16], index: 0, kind: input, shape index: {}]
  %s1 = inlined_call_operand.vmem [shape: bf16[16,4], index: 1, kind: input, shape index: {}]
  %s2 = inlined_call_operand.vmem [shape: f32[1,4], index: 2, kind: input, shape index: {}]
  %s3 = inlined_call_operand.vmem [shape: bf16[36,4], index: 3, kind: input, shape index: {}]
  %s4 = inlined_call_operand.vmem [shape: f32[1,4], index: 4, kind: input, shape index: {}]
  %s5 = inlined_call_operand.vmem [shape: bf16[4,16], index: 5, kind: input, shape index: {}]
  %s6 = inlined_call_operand.vmem [shape: f32[1,16], index: 6, kind: input, shape index: {}]
  %s7 = inlined_call_operand.hbm [shape: f32[2,16,16,16], index: 7, kind: output, shape index: {}]
  %s8 = sld [smem:[#allocation0]]
  $region61: #{tpu_custom_call.1} parent=0
    _
  %s10 = ssub.s32 1, %s8
  %s11 = scalar_select 0, %s10, %s8
  $region1: #{tpu_custom_call.1} parent=0
    #allocation2 [shape = 'u8[131072]{0}', space=vmem, size = 0x20000, scoped, tag = 'output window, operand 0']
    #allocation3 [shape = 's32[2]{0}', space=sflag, size = 0x8, scoped, tag = 'scoped memory for tpu_custom_call.1']
    %12 = vsyncpa [#allocation3], 0
    %s13 = scalar_lea.sflag [#allocation3], 1
    %14 = vsyncpa %s13, 0
    loop: start=0, step=1, limit=6
    $region2: #{tpu_custom_call.1} parent=1 // loop_pre_header
      _
    $region3: #{tpu_custom_call.1} parent=1 // loop_header
      %s16 = sphi 0, %s20
      %p17 = scmp.ge.s32.totalorder %s16, 6
      %s23 = sphi 0, %s35
      %s24 = sphi 0, %s31
      %s25 = sphi 0, %s23
      %s26 = sphi 0, %s24
      %s27 = sphi 0, %s25
      %s28 = sphi 0, %s26
      %s38 = sphi 0, %s40
      %s41 = sphi 0, %s38
      %s42 = sphi 0, %s41
      %s58 = sphi 0, %s42
      %s62 = sphi 0, %s62
      %s64 = sphi 0, %s62
      %s65 = sphi 0, %s64
      %s79 = sphi 0, %s65
      %s83 = sphi 0, %s83
      %s85 = sphi 0, %s83
      %s86 = sphi 0, %s85
      %s100 = sphi 0, %s86
      %s104 = sphi 0, %s104
      %s106 = sphi 0, %s104
      %s107 = sphi 0, %s106
      %s121 = sphi 0, %s107
      %s125 = sphi 0, %s125
      %s127 = sphi 0, %s125
      %s128 = sphi 0, %s127
      %s142 = sphi 0, %s128
      %s146 = sphi 0, %s146
      %s148 = sphi 0, %s146
      %s149 = sphi 0, %s148
      %s163 = sphi 0, %s149
      %s167 = sphi 0, %s167
      %s169 = sphi 0, %s167
      %s170 = sphi 0, %s169
      %s184 = sphi 0, %s170
      %s192 = sphi 0, %s194
      %s195 = sphi 0, %s192
      %s196 = sphi 0, %s195
      %s212 = sphi 0, %s196
    $region4: #{tpu_custom_call.1} parent=1 // loop_header_branch
      %19 = sbr.rel (%p17) target = $region8
    $region5: #{tpu_custom_call.1} parent=1 // loop_body
      %s21 = ssub.s32 %s16, 1
      %s22 = ssub.s32 %s16, 2
      %s29 = sadd.s32 1, %s24
      %p30 = scmp.ge.s32.totalorder %s29, 2
      %s31 = scalar_select %p30, 0, %s29
      %s32 = sadd.s32 1, %s23
      %s33 = scalar_select %p30, %s32, %s23
      %p34 = scmp.ge.s32.totalorder %s33, 2
      %s35 = scalar_select %p34, 0, %s33
      %s36 = ssub.s32 %s23, %s35
      %p37 = scmp.eq.s32.totalorder %s36, 0
      %s39 = sadd.s32 %s38, 1
      %s40 = scalar_select %p37, %s38, %s39
      %p43 = pneg %p37
      %p44 = scmp.eq.s32.totalorder %s16, 3
      %p45 = por %p43, %p44
      %p46 = scmp.ne.s32.totalorder %s38, %s41
      %p47 = scmp.eq.s32.totalorder %s16, 0
      %p48 = por %p46, %p47
      %p49 = scmp.ne.s32.totalorder %s38, %s41
      %p50 = scmp.eq.s32.totalorder %s21, 3
      %p51 = por %p49, %p50
      %p52 = scmp.ne.s32.totalorder %s41, %s42
      %p53 = scmp.eq.s32.totalorder %s21, 0
      %p54 = por %p52, %p53
      %p55 = scmp.ne.s32.totalorder %s41, %s42
      %p56 = scmp.eq.s32.totalorder %s22, 3
      %p57 = por %p55, %p56
      %p59 = scmp.ne.s32.totalorder %s42, %s58
      %p60 = scmp.eq.s32.totalorder %s22, 0
      %p61 = por %p59, %p60
      %s63 = sadd.s32 %s62, 1
      %p66 = scmp.eq.s32.totalorder %s16, 3
      %p67 = scmp.ne.s32.totalorder %s62, %s64
      %p68 = scmp.eq.s32.totalorder %s16, 0
      %p69 = por %p67, %p68
      %p70 = scmp.ne.s32.totalorder %s62, %s64
      %p71 = scmp.eq.s32.totalorder %s21, 3
      %p72 = por %p70, %p71
      %p73 = scmp.ne.s32.totalorder %s64, %s65
      %p74 = scmp.eq.s32.totalorder %s21, 0
      %p75 = por %p73, %p74
      %p76 = scmp.ne.s32.totalorder %s64, %s65
      %p77 = scmp.eq.s32.totalorder %s22, 3
      %p78 = por %p76, %p77
      %p80 = scmp.ne.s32.totalorder %s65, %s79
      %p81 = scmp.eq.s32.totalorder %s22, 0
      %p82 = por %p80, %p81
      %s84 = sadd.s32 %s83, 1
      %p87 = scmp.eq.s32.totalorder %s16, 3
      %p88 = scmp.ne.s32.totalorder %s83, %s85
      %p89 = scmp.eq.s32.totalorder %s16, 0
      %p90 = por %p88, %p89
      %p91 = scmp.ne.s32.totalorder %s83, %s85
      %p92 = scmp.eq.s32.totalorder %s21, 3
      %p93 = por %p91, %p92
      %p94 = scmp.ne.s32.totalorder %s85, %s86
      %p95 = scmp.eq.s32.totalorder %s21, 0
      %p96 = por %p94, %p95
      %p97 = scmp.ne.s32.totalorder %s85, %s86
      %p98 = scmp.eq.s32.totalorder %s22, 3
      %p99 = por %p97, %p98
      %p101 = scmp.ne.s32.totalorder %s86, %s100
      %p102 = scmp.eq.s32.totalorder %s22, 0
      %p103 = por %p101, %p102
      %s105 = sadd.s32 %s104, 1
      %p108 = scmp.eq.s32.totalorder %s16, 3
      %p109 = scmp.ne.s32.totalorder %s104, %s106
      %p110 = scmp.eq.s32.totalorder %s16, 0
      %p111 = por %p109, %p110
      %p112 = scmp.ne.s32.totalorder %s104, %s106
      %p113 = scmp.eq.s32.totalorder %s21, 3
      %p114 = por %p112, %p113
      %p115 = scmp.ne.s32.totalorder %s106, %s107
      %p116 = scmp.eq.s32.totalorder %s21, 0
      %p117 = por %p115, %p116
      %p118 = scmp.ne.s32.totalorder %s106, %s107
      %p119 = scmp.eq.s32.totalorder %s22, 3
      %p120 = por %p118, %p119
      %p122 = scmp.ne.s32.totalorder %s107, %s121
      %p123 = scmp.eq.s32.totalorder %s22, 0
      %p124 = por %p122, %p123
      %s126 = sadd.s32 %s125, 1
      %p129 = scmp.eq.s32.totalorder %s16, 3
      %p130 = scmp.ne.s32.totalorder %s125, %s127
      %p131 = scmp.eq.s32.totalorder %s16, 0
      %p132 = por %p130, %p131
      %p133 = scmp.ne.s32.totalorder %s125, %s127
      %p134 = scmp.eq.s32.totalorder %s21, 3
      %p135 = por %p133, %p134
      %p136 = scmp.ne.s32.totalorder %s127, %s128
      %p137 = scmp.eq.s32.totalorder %s21, 0
      %p138 = por %p136, %p137
      %p139 = scmp.ne.s32.totalorder %s127, %s128
      %p140 = scmp.eq.s32.totalorder %s22, 3
      %p141 = por %p139, %p140
      %p143 = scmp.ne.s32.totalorder %s128, %s142
      %p144 = scmp.eq.s32.totalorder %s22, 0
      %p145 = por %p143, %p144
      %s147 = sadd.s32 %s146, 1
      %p150 = scmp.eq.s32.totalorder %s16, 3
      %p151 = scmp.ne.s32.totalorder %s146, %s148
      %p152 = scmp.eq.s32.totalorder %s16, 0
      %p153 = por %p151, %p152
      %p154 = scmp.ne.s32.totalorder %s146, %s148
      %p155 = scmp.eq.s32.totalorder %s21, 3
      %p156 = por %p154, %p155
      %p157 = scmp.ne.s32.totalorder %s148, %s149
      %p158 = scmp.eq.s32.totalorder %s21, 0
      %p159 = por %p157, %p158
      %p160 = scmp.ne.s32.totalorder %s148, %s149
      %p161 = scmp.eq.s32.totalorder %s22, 3
      %p162 = por %p160, %p161
      %p164 = scmp.ne.s32.totalorder %s149, %s163
      %p165 = scmp.eq.s32.totalorder %s22, 0
      %p166 = por %p164, %p165
      %s168 = sadd.s32 %s167, 1
      %p171 = scmp.eq.s32.totalorder %s16, 3
      %p172 = scmp.ne.s32.totalorder %s167, %s169
      %p173 = scmp.eq.s32.totalorder %s16, 0
      %p174 = por %p172, %p173
      %p175 = scmp.ne.s32.totalorder %s167, %s169
      %p176 = scmp.eq.s32.totalorder %s21, 3
      %p177 = por %p175, %p176
      %p178 = scmp.ne.s32.totalorder %s169, %s170
      %p179 = scmp.eq.s32.totalorder %s21, 0
      %p180 = por %p178, %p179
      %p181 = scmp.ne.s32.totalorder %s169, %s170
      %p182 = scmp.eq.s32.totalorder %s22, 3
      %p183 = por %p181, %p182
      %p185 = scmp.ne.s32.totalorder %s170, %s184
      %p186 = scmp.eq.s32.totalorder %s22, 0
      %p187 = por %p185, %p186
      %s188 = ssub.s32 %s23, %s35
      %s189 = ssub.s32 %s24, %s31
      %s190 = sor.u32 %s188, %s189
      %p191 = scmp.eq.s32.totalorder %s190, 0
      %s193 = sadd.s32 %s192, 1
      %s194 = scalar_select %p191, %s192, %s193
      %p197 = pneg %p191
      %p198 = scmp.eq.s32.totalorder %s16, 3
      %p199 = por %p197, %p198
      %p200 = scmp.ne.s32.totalorder %s192, %s195
      %p201 = scmp.eq.s32.totalorder %s16, 0
      %p202 = por %p200, %p201
      %p203 = scmp.ne.s32.totalorder %s192, %s195
      %p204 = scmp.eq.s32.totalorder %s21, 3
      %p205 = por %p203, %p204
      %p206 = scmp.ne.s32.totalorder %s195, %s196
      %p207 = scmp.eq.s32.totalorder %s21, 0
      %p208 = por %p206, %p207
      %p209 = scmp.ne.s32.totalorder %s195, %s196
      %p210 = scmp.eq.s32.totalorder %s22, 3
      %p211 = por %p209, %p210
      %p213 = scmp.ne.s32.totalorder %s196, %s212
      %p214 = scmp.eq.s32.totalorder %s22, 0
      %p215 = por %p213, %p214
      %p216 = scmp.le.s32.totalorder 1, %s16
      %p217 = scmp.lt.s32.totalorder %s16, 5
      %p218 = pnand %p216, %p217
      %p219 = pneg %p218
      // Predicated region
      $region9: #{tpu_custom_call.1} parent=5 // pred_check
        _
      $region10: #{tpu_custom_call.1} parent=5 // pred_check_branch
        %221 = sbr.rel (%p218) target = $region12
      $region11: #{tpu_custom_call.1} parent=5 // pred_region
        %s222 = ssub.s32 %s16, 1
        // Predicated region
        $region13: #{tpu_custom_call.1} parent=11 // pred_check
          %p223 = pneg %p75
        $region14: #{tpu_custom_call.1} parent=11 // pred_check_branch
          %225 = sbr.rel (%p223) target = $region16
        $region15: #{tpu_custom_call.1} parent=11 // pred_region
          _
        $region16: #{tpu_custom_call.1} parent=11 // pred_fallthru
          _
        // Predicated region
        $region17: #{tpu_custom_call.1} parent=11 // pred_check
          %p226 = pneg %p96
        $region18: #{tpu_custom_call.1} parent=11 // pred_check_branch
          %228 = sbr.rel (%p226) target = $region20
        $region19: #{tpu_custom_call.1} parent=11 // pred_region
          _
        $region20: #{tpu_custom_call.1} parent=11 // pred_fallthru
          _
        // Predicated region
        $region21: #{tpu_custom_call.1} parent=11 // pred_check
          %p229 = pneg %p117
        $region22: #{tpu_custom_call.1} parent=11 // pred_check_branch
          %231 = sbr.rel (%p229) target = $region24
        $region23: #{tpu_custom_call.1} parent=11 // pred_region
          _
        $region24: #{tpu_custom_call.1} parent=11 // pred_fallthru
          _
        // Predicated region
        $region25: #{tpu_custom_call.1} parent=11 // pred_check
          %p232 = pneg %p138
        $region26: #{tpu_custom_call.1} parent=11 // pred_check_branch
          %234 = sbr.rel (%p232) target = $region28
        $region27: #{tpu_custom_call.1} parent=11 // pred_region
          _
        $region28: #{tpu_custom_call.1} parent=11 // pred_fallthru
          _
        // Predicated region
        $region29: #{tpu_custom_call.1} parent=11 // pred_check
          %p235 = pneg %p159
        $region30: #{tpu_custom_call.1} parent=11 // pred_check_branch
          %237 = sbr.rel (%p235) target = $region32
        $region31: #{tpu_custom_call.1} parent=11 // pred_region
          _
        $region32: #{tpu_custom_call.1} parent=11 // pred_fallthru
          _
        // Predicated region
        $region33: #{tpu_custom_call.1} parent=11 // pred_check
          %p238 = pneg %p180
        $region34: #{tpu_custom_call.1} parent=11 // pred_check_branch
          %240 = sbr.rel (%p238) target = $region36
        $region35: #{tpu_custom_call.1} parent=11 // pred_region
          _
        $region36: #{tpu_custom_call.1} parent=11 // pred_fallthru
          _
      $region12: #{tpu_custom_call.1} parent=5 // pred_fallthru
        _
      %p241 = scmp.lt.s32.totalorder %s16, 4
      // Predicated region
      $region37: #{tpu_custom_call.1} parent=5 // pred_check
        %p242 = pneg %p241
      $region38: #{tpu_custom_call.1} parent=5 // pred_check_branch
        %244 = sbr.rel (%p242) target = $region40
      $region39: #{tpu_custom_call.1} parent=5 // pred_region
        // Predicated region
        $region41: #{tpu_custom_call.1} parent=39 // pred_check
          %p245 = pneg %p48
        $region42: #{tpu_custom_call.1} parent=39 // pred_check_branch
          %247 = sbr.rel (%p245) target = $region44
        $region43: #{tpu_custom_call.1} parent=39 // pred_region
          %p248 = scmp.lt.s32.totalorder %s23, 1
          %s249 = scalar_select %p248, %s23, 1
          %s250 = smul.addr %s249, 36
          %s251 = smul.addr %s250, 8
          %s252 = scalar_lea.vmem %s0, %s251
        $region44: #{tpu_custom_call.1} parent=39 // pred_fallthru
          _
      $region40: #{tpu_custom_call.1} parent=5 // pred_fallthru
        _
      %p253 = scmp.le.s32.totalorder 1, %s16
      %p254 = scmp.lt.s32.totalorder %s16, 5
      %p255 = pnand %p253, %p254
      %p256 = pneg %p255
      // Predicated region
      $region45: #{tpu_custom_call.1} parent=5 // pred_check
        _
      $region46: #{tpu_custom_call.1} parent=5 // pred_check_branch
        %258 = sbr.rel (%p255) target = $region48
      $region47: #{tpu_custom_call.1} parent=5 // pred_region
        %s259 = ssub.s32 %s16, 1
        %p260 = scmp.lt.s32.totalorder %s25, 1
        %s261 = scalar_select %p260, %s25, 1
        %s262 = smul.addr %s261, 36
        %s263 = smul.addr %s262, 8
        %s264 = scalar_lea.vmem %s0, %s263
        %p265 = pneg %p54
        %p266 = pneg %p51
        %p267 = pneg %p75
        %p268 = pneg %p72
        %p269 = pneg %p96
        %p270 = pneg %p93
        %p271 = pneg %p117
        %p272 = pneg %p114
        %p273 = pneg %p138
        %p274 = pneg %p135
        %p275 = pneg %p159
        %p276 = pneg %p156
        %p277 = pneg %p180
        %p278 = pneg %p177
        %p279 = pneg %p208
        %p280 = pneg %p205
        %s281 = sand.u32 %s195, 1
        %s282 = scalar_lea.sflag [#allocation3], %s281
        %s283 = sand.u32 %s195, 1
        %s284 = smul.addr %s283, 128
        %s285 = scalar_lea.vmem [#allocation2], %s284
        %p286 = scmp.lt.s32.totalorder %s25, 1
        %s287 = scalar_select %p286, %s25, 1
        %s288 = smul.addr %s287, 36
        %s289 = smul.addr %s288, 8
        %s290 = scalar_lea.vmem %s0, %s289
        %s291 = smul.u32 8, %s26
        %s293 = smul.u32 %s26, 8
        %s294 = smul.u32 %s293, 16
        %s295 = scalar_lea.vmem %s290, %s294
        %v296 = vld [vmem:[%s295] sm:$0xff]
        %v297 = vld [vmem:[%s295 + $0x8] sm:$0xff]
        %v298 = vld [vmem:[%s295 + $0x10] sm:$0xff]
        %v299 = vld [vmem:[%s295 + $0x18] sm:$0xff]
        %v300 = vld [vmem:[%s295 + $0x20] sm:$0xff]
        %v301 = vld [vmem:[%s295 + $0x28] sm:$0xff]
        %v302 = vld [vmem:[%s295 + $0x30] sm:$0xff]
        %v303 = vld [vmem:[%s295 + $0x38] sm:$0xff]
        %v304 = vld [vmem:[%s295 + $0x40] sm:$0xff]
        %v305 = vld [vmem:[%s295 + $0x48] sm:$0xff]
        %v306 = vld [vmem:[%s295 + $0x50] sm:$0xff]
        %v307 = vld [vmem:[%s295 + $0x58] sm:$0xff]
        %v308 = vld [vmem:[%s295 + $0x60] sm:$0xff]
        %v309 = vld [vmem:[%s295 + $0x68] sm:$0xff]
        %v310 = vld [vmem:[%s295 + $0x70] sm:$0xff]
        %v311 = vld [vmem:[%s295 + $0x78] sm:$0xff]
        %v312 = vld [vmem:[%s295 + $0x80] sm:$0xff]
        %v313 = vld [vmem:[%s295 + $0x88] sm:$0xff]
        %v314 = vld [vmem:[%s295 + $0x90] sm:$0xff]
        %v315 = vld [vmem:[%s295 + $0x98] sm:$0xff]
        %v316 = vpack.c.bf16 %v297, %v296
        %v317 = vpack.c.bf16 %v299, %v298
        %v318 = vpack.c.bf16 %v301, %v300
        %v319 = vpack.c.bf16 %v303, %v302
        %v320 = vpack.c.bf16 %v305, %v304
        %v321 = vpack.c.bf16 %v307, %v306
        %v322 = vpack.c.bf16 %v309, %v308
        %v323 = vpack.c.bf16 %v311, %v310
        %v324 = vpack.c.bf16 %v313, %v312
        %v325 = vpack.c.bf16 %v315, %v314
        %v326 = vld [vmem:[%s1] sm:$0xf]
        %v327 = vld [vmem:[%s1 + $0x4] sm:$0xf]
        %v328 = vld [vmem:[%s2] sm:$0x1]
        %v330 = vlaneseq
        %v331 = vshrl.u32 %v330, 7
        %v332 = vsub.s32 0, %v331
        %v333 = vrot.slane %v328, %v332
        %v337 = vunpack.c.l.b16 %v326
        %v338 = vunpack.c.l.b16 %v327
        %v339 = vpack.c.b16 %v338, %v337
        %vm341 = vcmask 130048
        %v343 = vsel %vm341, %v316, 0
        %v346 = vsel %vm341, %v317, 0
        %v349 = vsel %vm341, %v318, 0
        %v352 = vsel %vm341, %v319, 0
        %v355 = vsel %vm341, %v320, 0
        %v358 = vsel %vm341, %v321, 0
        %v361 = vsel %vm341, %v322, 0
        %v364 = vsel %vm341, %v323, 0
        %v367 = vsel %vm341, %v324, 0
        %v370 = vsel %vm341, %v325, 0
        %372 = vmatprep.subr.bf16.mxu0 0
        %373 = vmatpush1.bf16.msra.mxu0 0
        %374 = vmatprep.subr.bf16.mxu0 0
        %375 = vmatpush1.bf16.msra.mxu0 0
        %376 = vmatprep.subr.bf16.mxu0 0
        %377 = vmatpush1.bf16.msra.mxu0 0
        %378 = vmatprep.subr.bf16.mxu0 0
        %379 = vmatpush1.bf16.msra.mxu0 0
        %380 = vmatprep.subr.bf16.mxu0 0
        %381 = vmatpush1.bf16.msra.mxu0 0
        %382 = vmatprep.subr.bf16.mxu0 0
        %383 = vmatpush1.bf16.msra.mxu0 0
        %384 = vmatprep.subr.bf16.mxu0 0
        %385 = vmatpush1.bf16.msra.mxu0 0
        %386 = vmatprep.subr.bf16.mxu0 0
        %387 = vmatpush1.bf16.msra.mxu0 %v339
        %388 = vmatprep.subr.bf16.mxu0 0
        %389 = vmatpush2.bf16.msra.mxu0 0
        %390 = vmatprep.subr.bf16.mxu0 0
        %391 = vmatpush2.bf16.msra.mxu0 0
        %392 = vmatprep.subr.bf16.mxu0 0
        %393 = vmatpush2.bf16.msra.mxu0 0
        %394 = vmatprep.subr.bf16.mxu0 0
        %395 = vmatpush2.bf16.msra.mxu0 0
        %396 = vmatprep.subr.bf16.mxu0 0
        %397 = vmatpush2.bf16.msra.mxu0 0
        %398 = vmatprep.subr.bf16.mxu0 0
        %399 = vmatpush2.bf16.msra.mxu0 0
        %400 = vmatprep.subr.bf16.mxu0 0
        %401 = vmatpush2.bf16.msra.mxu0 0
        %402 = vmatprep.subr.bf16.mxu0 0
        %403 = vmatpush2.bf16.msra.mxu0 0
        %404 = vmatprep.mubr.bf16.mxu0 0
        %405 = vmatmul.mubr.bf16.gmra.mxu0 %v343
        %v406 = vpop.f32.mrf.mxu0
        %v407 = vadd.f32 %v333, %v406
        %v408 = vpop.f32.mrf.mxu0
        %v409 = vpop.f32.mrf.mxu0
        %v410 = vadd.f32 %v333, %v409
        %v411 = vpop.f32.mrf.mxu0
        %412 = vmatprep.mubr.bf16.mxu0 0
        %413 = vmatmul.mubr.bf16.gmra.mxu0 %v346
        %v414 = vpop.f32.mrf.mxu0
        %v415 = vadd.f32 %v333, %v414
        %v416 = vpop.f32.mrf.mxu0
        %v417 = vpop.f32.mrf.mxu0
        %v418 = vadd.f32 %v333, %v417
        %v419 = vpop.f32.mrf.mxu0
        %420 = vmatprep.mubr.bf16.mxu0 0
        %421 = vmatmul.mubr.bf16.gmra.mxu0 %v349
        %v422 = vpop.f32.mrf.mxu0
        %v423 = vadd.f32 %v333, %v422
        %v424 = vpop.f32.mrf.mxu0
        %v425 = vpop.f32.mrf.mxu0
        %v426 = vadd.f32 %v333, %v425
        %v427 = vpop.f32.mrf.mxu0
        %428 = vmatprep.mubr.bf16.mxu0 0
        %429 = vmatmul.mubr.bf16.gmra.mxu0 %v352
        %v430 = vpop.f32.mrf.mxu0
        %v431 = vadd.f32 %v333, %v430
        %v432 = vpop.f32.mrf.mxu0
        %v433 = vpop.f32.mrf.mxu0
        %v434 = vadd.f32 %v333, %v433
        %v435 = vpop.f32.mrf.mxu0
        %436 = vmatprep.mubr.bf16.mxu0 0
        %437 = vmatmul.mubr.bf16.gmra.mxu0 %v355
        %v438 = vpop.f32.mrf.mxu0
        %v439 = vadd.f32 %v333, %v438
        %v440 = vpop.f32.mrf.mxu0
        %v441 = vpop.f32.mrf.mxu0
        %v442 = vadd.f32 %v333, %v441
        %v443 = vpop.f32.mrf.mxu0
        %444 = vmatprep.mubr.bf16.mxu0 0
        %445 = vmatmul.mubr.bf16.gmra.mxu0 %v358
        %v446 = vpop.f32.mrf.mxu0
        %v447 = vadd.f32 %v333, %v446
        %v448 = vpop.f32.mrf.mxu0
        %v449 = vpop.f32.mrf.mxu0
        %v450 = vadd.f32 %v333, %v449
        %v451 = vpop.f32.mrf.mxu0
        %452 = vmatprep.mubr.bf16.mxu0 0
        %453 = vmatmul.mubr.bf16.gmra.mxu0 %v361
        %v454 = vpop.f32.mrf.mxu0
        %v455 = vadd.f32 %v333, %v454
        %v456 = vpop.f32.mrf.mxu0
        %v457 = vpop.f32.mrf.mxu0
        %v458 = vadd.f32 %v333, %v457
        %v459 = vpop.f32.mrf.mxu0
        %460 = vmatprep.mubr.bf16.mxu0 0
        %461 = vmatmul.mubr.bf16.gmra.mxu0 %v364
        %v462 = vpop.f32.mrf.mxu0
        %v463 = vadd.f32 %v333, %v462
        %v464 = vpop.f32.mrf.mxu0
        %v465 = vpop.f32.mrf.mxu0
        %v466 = vadd.f32 %v333, %v465
        %v467 = vpop.f32.mrf.mxu0
        %468 = vmatprep.mubr.bf16.mxu0 0
        %469 = vmatmul.mubr.bf16.gmra.mxu0 %v367
        %v470 = vpop.f32.mrf.mxu0
        %v471 = vadd.f32 %v333, %v470
        %v472 = vpop.f32.mrf.mxu0
        %v473 = vpop.f32.mrf.mxu0
        %v474 = vadd.f32 %v333, %v473
        %v475 = vpop.f32.mrf.mxu0
        %476 = vmatprep.mubr.bf16.mxu0 0
        %477 = vmatmul.mubr.bf16.gmra.mxu0 %v370
        %v478 = vpop.f32.mrf.mxu0
        %v479 = vadd.f32 %v333, %v478
        %v480 = vpop.f32.mrf.mxu0
        %v481 = vpop.f32.mrf.mxu0
        %v482 = vadd.f32 %v333, %v481
        %v483 = vpop.f32.mrf.mxu0
        %484 = vdwg.mxu0
        %v485 = vmax.f32 %v407, 0.0
        %v486 = vmax.f32 %v410, 0.0
        %v487 = vmax.f32 %v415, 0.0
        %v488 = vmax.f32 %v418, 0.0
        %v489 = vmax.f32 %v423, 0.0
        %v490 = vmax.f32 %v426, 0.0
        %v491 = vmax.f32 %v431, 0.0
        %v492 = vmax.f32 %v434, 0.0
        %v493 = vmax.f32 %v439, 0.0
        %v494 = vmax.f32 %v442, 0.0
        %v495 = vmax.f32 %v447, 0.0
        %v496 = vmax.f32 %v450, 0.0
        %v497 = vmax.f32 %v455, 0.0
        %v498 = vmax.f32 %v458, 0.0
        %v499 = vmax.f32 %v463, 0.0
        %v500 = vmax.f32 %v466, 0.0
        %v501 = vmax.f32 %v471, 0.0
        %v502 = vmax.f32 %v474, 0.0
        %v503 = vmax.f32 %v479, 0.0
        %v504 = vmax.f32 %v482, 0.0
        %v505 = vstv %s293
        %v506 = vadd.s32 %v505, 1
        %v507 = vadd.s32 %v505, 2
        %v508 = vadd.s32 %v505, 3
        %v509 = vadd.s32 %v505, 4
        %v510 = vadd.s32 %v505, 5
        %v511 = vadd.s32 %v505, 6
        %v512 = vadd.s32 %v505, 7
        %v513 = vadd.s32 %v505, 8
        %v514 = vadd.s32 %v505, 9
        %vm515 = vcmp.ge.s32.totalorder %v505, 1
        %vm516 = vcmp.ge.s32.totalorder %v506, 1
        %vm517 = vcmp.ge.s32.totalorder %v507, 1
        %vm518 = vcmp.ge.s32.totalorder %v508, 1
        %vm519 = vcmp.ge.s32.totalorder %v509, 1
        %vm520 = vcmp.ge.s32.totalorder %v510, 1
        %vm521 = vcmp.ge.s32.totalorder %v511, 1
        %vm522 = vcmp.ge.s32.totalorder %v512, 1
        %vm523 = vcmp.ge.s32.totalorder %v513, 1
        %vm524 = vcmp.ge.s32.totalorder %v514, 1
        %vm525 = vcmp.le.s32.totalorder %v505, 16
        %vm526 = vcmp.le.s32.totalorder %v506, 16
        %vm527 = vcmp.le.s32.totalorder %v507, 16
        %vm528 = vcmp.le.s32.totalorder %v508, 16
        %vm529 = vcmp.le.s32.totalorder %v509, 16
        %vm530 = vcmp.le.s32.totalorder %v510, 16
        %vm531 = vcmp.le.s32.totalorder %v511, 16
        %vm532 = vcmp.le.s32.totalorder %v512, 16
        %vm533 = vcmp.le.s32.totalorder %v513, 16
        %vm534 = vcmp.le.s32.totalorder %v514, 16
        %vm535 = vmand %vm515, %vm525
        %vm536 = vmand %vm516, %vm526
        %vm537 = vmand %vm517, %vm527
        %vm538 = vmand %vm518, %vm528
        %vm539 = vmand %vm519, %vm529
        %vm540 = vmand %vm520, %vm530
        %vm541 = vmand %vm521, %vm531
        %vm542 = vmand %vm522, %vm532
        %vm543 = vmand %vm523, %vm533
        %vm544 = vmand %vm524, %vm534
        %v545 = vsel %vm535, 1, 0
        %v546 = vsel %vm536, 1, 0
        %v547 = vsel %vm537, 1, 0
        %v548 = vsel %vm538, 1, 0
        %v549 = vsel %vm539, 1, 0
        %v550 = vsel %vm540, 1, 0
        %v551 = vsel %vm541, 1, 0
        %v552 = vsel %vm542, 1, 0
        %v553 = vsel %vm543, 1, 0
        %v554 = vsel %vm544, 1, 0
        %vm555 = vcmp.eq.s32.totalorder %v545, 1
        %vm556 = vcmp.eq.s32.totalorder %v546, 1
        %vm557 = vcmp.eq.s32.totalorder %v547, 1
        %vm558 = vcmp.eq.s32.totalorder %v548, 1
        %vm559 = vcmp.eq.s32.totalorder %v549, 1
        %vm560 = vcmp.eq.s32.totalorder %v550, 1
        %vm561 = vcmp.eq.s32.totalorder %v551, 1
        %vm562 = vcmp.eq.s32.totalorder %v552, 1
        %vm563 = vcmp.eq.s32.totalorder %v553, 1
        %vm564 = vcmp.eq.s32.totalorder %v554, 1
        %v565 = vsel %vm555, %v485, 0.0
        %v566 = vsel %vm555, %v486, 0.0
        %v567 = vsel %vm556, %v487, 0.0
        %v568 = vsel %vm556, %v488, 0.0
        %v569 = vsel %vm557, %v489, 0.0
        %v570 = vsel %vm557, %v490, 0.0
        %v571 = vsel %vm558, %v491, 0.0
        %v572 = vsel %vm558, %v492, 0.0
        %v573 = vsel %vm559, %v493, 0.0
        %v574 = vsel %vm559, %v494, 0.0
        %v575 = vsel %vm560, %v495, 0.0
        %v576 = vsel %vm560, %v496, 0.0
        %v577 = vsel %vm561, %v497, 0.0
        %v578 = vsel %vm561, %v498, 0.0
        %v579 = vsel %vm562, %v499, 0.0
        %v580 = vsel %vm562, %v500, 0.0
        %v581 = vsel %vm563, %v501, 0.0
        %v582 = vsel %vm563, %v502, 0.0
        %v583 = vsel %vm564, %v503, 0.0
        %v584 = vsel %vm564, %v504, 0.0
        %v585 = vpack.c.bf16 %v566, %v565
        %v586 = vpack.c.bf16 %v568, %v567
        %v587 = vpack.c.bf16 %v570, %v569
        %v588 = vpack.c.bf16 %v572, %v571
        %v589 = vpack.c.bf16 %v574, %v573
        %v590 = vpack.c.bf16 %v576, %v575
        %v591 = vpack.c.bf16 %v578, %v577
        %v592 = vpack.c.bf16 %v580, %v579
        %v593 = vpack.c.bf16 %v582, %v581
        %v594 = vpack.c.bf16 %v584, %v583
        %v596 = vshrl.u32 %v585, 16
        %v598 = vrot.slane %v596, 7
        %v599 = vshll.u32 %v585, 16
        %v601 = vor.u32 %v598, %v599
        %v603 = vshrl.u32 %v586, 16
        %v605 = vrot.slane %v603, 7
        %v606 = vshll.u32 %v586, 16
        %v608 = vor.u32 %v605, %v606
        %v610 = vshrl.u32 %v587, 16
        %v612 = vrot.slane %v610, 7
        %v613 = vshll.u32 %v587, 16
        %v615 = vor.u32 %v612, %v613
        %v617 = vshrl.u32 %v588, 16
        %v619 = vrot.slane %v617, 7
        %v620 = vshll.u32 %v588, 16
        %v622 = vor.u32 %v619, %v620
        %v624 = vshrl.u32 %v589, 16
        %v626 = vrot.slane %v624, 7
        %v627 = vshll.u32 %v589, 16
        %v629 = vor.u32 %v626, %v627
        %v631 = vshrl.u32 %v590, 16
        %v633 = vrot.slane %v631, 7
        %v634 = vshll.u32 %v590, 16
        %v636 = vor.u32 %v633, %v634
        %v638 = vshrl.u32 %v591, 16
        %v640 = vrot.slane %v638, 7
        %v641 = vshll.u32 %v591, 16
        %v643 = vor.u32 %v640, %v641
        %v645 = vshrl.u32 %v592, 16
        %v647 = vrot.slane %v645, 7
        %v648 = vshll.u32 %v592, 16
        %v650 = vor.u32 %v647, %v648
        %v652 = vshrl.u32 %v593, 16
        %v654 = vrot.slane %v652, 7
        %v655 = vshll.u32 %v593, 16
        %v657 = vor.u32 %v654, %v655
        %v659 = vshrl.u32 %v594, 16
        %v661 = vrot.slane %v659, 7
        %v662 = vshll.u32 %v594, 16
        %v664 = vor.u32 %v661, %v662
        %vm685 = vcmask 1040384
        %vm686 = vsmask.f32 256
        %vm687 = vmand %vm685, %vm686
        %v688 = vsel %vm687, 0, %v601
        %v689 = vsel %vm687, 0, %v608
        %v690 = vsel %vm687, 0, %v615
        %v691 = vsel %vm687, 0, %v622
        %v692 = vsel %vm687, 0, %v629
        %v693 = vsel %vm687, 0, %v636
        %v694 = vsel %vm687, 0, %v643
        %v695 = vsel %vm687, 0, %v650
        %v696 = vsel %vm687, 0, %v657
        %v697 = vsel %vm687, 0, %v664
        %v698 = vsel %vm687, %v598, 0
        %v699 = vsel %vm687, %v605, 0
        %v700 = vsel %vm687, %v612, 0
        %v701 = vsel %vm687, %v619, 0
        %v702 = vsel %vm687, %v626, 0
        %v703 = vsel %vm687, %v633, 0
        %v704 = vsel %vm687, %v640, 0
        %v705 = vsel %vm687, %v647, 0
        %v706 = vsel %vm687, %v654, 0
        %v707 = vsel %vm687, %v661, 0
        %vm708 = vsmask.f32 7424
        %v710 = vshrl.u32 %v688, 16
        %v712 = vshll.u32 %v688, 16
        %v714 = vrot.slane %v712, 1
        %v715 = vor.u32 %v710, %v714
        %v717 = vshll.u32 %v698, 16
        %v719 = vrot.slane %v717, 1
        %v720 = vsel %vm708, %v715, %v719
        %v722 = vshrl.u32 %v689, 16
        %v724 = vshll.u32 %v689, 16
        %v726 = vrot.slane %v724, 1
        %v727 = vor.u32 %v722, %v726
        %v729 = vshll.u32 %v699, 16
        %v731 = vrot.slane %v729, 1
        %v732 = vsel %vm708, %v727, %v731
        %v734 = vshrl.u32 %v690, 16
        %v736 = vshll.u32 %v690, 16
        %v738 = vrot.slane %v736, 1
        %v739 = vor.u32 %v734, %v738
        %v741 = vshll.u32 %v700, 16
        %v743 = vrot.slane %v741, 1
        %v744 = vsel %vm708, %v739, %v743
        %v746 = vshrl.u32 %v691, 16
        %v748 = vshll.u32 %v691, 16
        %v750 = vrot.slane %v748, 1
        %v751 = vor.u32 %v746, %v750
        %v753 = vshll.u32 %v701, 16
        %v755 = vrot.slane %v753, 1
        %v756 = vsel %vm708, %v751, %v755
        %v758 = vshrl.u32 %v692, 16
        %v760 = vshll.u32 %v692, 16
        %v762 = vrot.slane %v760, 1
        %v763 = vor.u32 %v758, %v762
        %v765 = vshll.u32 %v702, 16
        %v767 = vrot.slane %v765, 1
        %v768 = vsel %vm708, %v763, %v767
        %v770 = vshrl.u32 %v693, 16
        %v772 = vshll.u32 %v693, 16
        %v774 = vrot.slane %v772, 1
        %v775 = vor.u32 %v770, %v774
        %v777 = vshll.u32 %v703, 16
        %v779 = vrot.slane %v777, 1
        %v780 = vsel %vm708, %v775, %v779
        %v782 = vshrl.u32 %v694, 16
        %v784 = vshll.u32 %v694, 16
        %v786 = vrot.slane %v784, 1
        %v787 = vor.u32 %v782, %v786
        %v789 = vshll.u32 %v704, 16
        %v791 = vrot.slane %v789, 1
        %v792 = vsel %vm708, %v787, %v791
        %v794 = vshrl.u32 %v695, 16
        %v796 = vshll.u32 %v695, 16
        %v798 = vrot.slane %v796, 1
        %v799 = vor.u32 %v794, %v798
        %v801 = vshll.u32 %v705, 16
        %v803 = vrot.slane %v801, 1
        %v804 = vsel %vm708, %v799, %v803
        %vm821 = vcmask 1046528
        %v822 = vrot.slane %v688, 1
        %v823 = vrot.slane %v698, 1
        %v824 = vsel %vm821, %v822, %v823
        %v825 = vrot.slane %v689, 1
        %v826 = vrot.slane %v699, 1
        %v827 = vsel %vm821, %v825, %v826
        %v828 = vrot.slane %v690, 1
        %v829 = vrot.slane %v700, 1
        %v830 = vsel %vm821, %v828, %v829
        %v831 = vrot.slane %v691, 1
        %v832 = vrot.slane %v701, 1
        %v833 = vsel %vm821, %v831, %v832
        %v834 = vrot.slane %v692, 1
        %v835 = vrot.slane %v702, 1
        %v836 = vsel %vm821, %v834, %v835
        %v837 = vrot.slane %v693, 1
        %v838 = vrot.slane %v703, 1
        %v839 = vsel %vm821, %v837, %v838
        %v840 = vrot.slane %v694, 1
        %v841 = vrot.slane %v704, 1
        %v842 = vsel %vm821, %v840, %v841
        %v843 = vrot.slane %v695, 1
        %v844 = vrot.slane %v705, 1
        %v845 = vsel %vm821, %v843, %v844
        %v847 = vshrl.u32 %v696, 16
        %v849 = vshll.u32 %v696, 16
        %v851 = vrot.slane %v849, 1
        %v852 = vor.u32 %v847, %v851
        %v854 = vshll.u32 %v706, 16
        %v856 = vrot.slane %v854, 1
        %v857 = vsel %vm708, %v852, %v856
        %v860 = vrot.slane %v696, 1
        %v861 = vrot.slane %v706, 1
        %v862 = vsel %vm821, %v860, %v861
        %v864 = vshrl.u32 %v697, 16
        %v866 = vshll.u32 %v697, 16
        %v868 = vrot.slane %v866, 1
        %v869 = vor.u32 %v864, %v868
        %v871 = vshll.u32 %v707, 16
        %v873 = vrot.slane %v871, 1
        %v874 = vsel %vm708, %v869, %v873
        %v877 = vrot.slane %v697, 1
        %v878 = vrot.slane %v707, 1
        %v879 = vsel %vm821, %v877, %v878
        %880 = vrot.lane.b32.xlu0 %v720, 4
        %v881 = vpop.permute.xlu0 %880
        %882 = vrot.lane.b32.xlu0 %v732, 4
        %v883 = vpop.permute.xlu0 %882
        %884 = vrot.lane.b32.xlu0 %v744, 4
        %v885 = vpop.permute.xlu0 %884
        %886 = vrot.lane.b32.xlu0 %v756, 4
        %v887 = vpop.permute.xlu0 %886
        %888 = vrot.lane.b32.xlu0 %v768, 4
        %v889 = vpop.permute.xlu0 %888
        %890 = vrot.lane.b32.xlu0 %v780, 4
        %v891 = vpop.permute.xlu0 %890
        %892 = vrot.lane.b32.xlu0 %v792, 4
        %v893 = vpop.permute.xlu0 %892
        %894 = vrot.lane.b32.xlu0 %v804, 4
        %v895 = vpop.permute.xlu0 %894
        %896 = vrot.lane.b32.xlu0 %v824, 8
        %v897 = vpop.permute.xlu0 %896
        %898 = vrot.lane.b32.xlu0 %v827, 8
        %v899 = vpop.permute.xlu0 %898
        %900 = vrot.lane.b32.xlu0 %v830, 8
        %v901 = vpop.permute.xlu0 %900
        %902 = vrot.lane.b32.xlu0 %v833, 8
        %v903 = vpop.permute.xlu0 %902
        %904 = vrot.lane.b32.xlu0 %v836, 8
        %v905 = vpop.permute.xlu0 %904
        %906 = vrot.lane.b32.xlu0 %v839, 8
        %v907 = vpop.permute.xlu0 %906
        %908 = vrot.lane.b32.xlu0 %v842, 8
        %v909 = vpop.permute.xlu0 %908
        %910 = vrot.lane.b32.xlu0 %v845, 8
        %v911 = vpop.permute.xlu0 %910
        %912 = vrot.lane.b32.xlu0 %v689, 12
        %v913 = vpop.permute.xlu0 %912
        %914 = vrot.lane.b32.xlu0 %v690, 12
        %v915 = vpop.permute.xlu0 %914
        %916 = vrot.lane.b32.xlu0 %v691, 12
        %v917 = vpop.permute.xlu0 %916
        %918 = vrot.lane.b32.xlu0 %v692, 12
        %v919 = vpop.permute.xlu0 %918
        %920 = vrot.lane.b32.xlu0 %v693, 12
        %v921 = vpop.permute.xlu0 %920
        %922 = vrot.lane.b32.xlu0 %v694, 12
        %v923 = vpop.permute.xlu0 %922
        %924 = vrot.lane.b32.xlu0 %v695, 12
        %v925 = vpop.permute.xlu0 %924
        %926 = vrot.lane.b32.xlu0 %v696, 12
        %v927 = vpop.permute.xlu0 %926
        %928 = vrot.lane.b32.xlu0 %v732, 16
        %v929 = vpop.permute.xlu0 %928
        %930 = vrot.lane.b32.xlu0 %v744, 16
        %v931 = vpop.permute.xlu0 %930
        %932 = vrot.lane.b32.xlu0 %v756, 16
        %v933 = vpop.permute.xlu0 %932
        %934 = vrot.lane.b32.xlu0 %v768, 16
        %v935 = vpop.permute.xlu0 %934
        %936 = vrot.lane.b32.xlu0 %v780, 16
        %v937 = vpop.permute.xlu0 %936
        %938 = vrot.lane.b32.xlu0 %v792, 16
        %v939 = vpop.permute.xlu0 %938
        %940 = vrot.lane.b32.xlu0 %v804, 16
        %v941 = vpop.permute.xlu0 %940
        %942 = vrot.lane.b32.xlu0 %v857, 16
        %v943 = vpop.permute.xlu0 %942
        %944 = vrot.lane.b32.xlu0 %v827, 20
        %v945 = vpop.permute.xlu0 %944
        %946 = vrot.lane.b32.xlu0 %v830, 20
        %v947 = vpop.permute.xlu0 %946
        %948 = vrot.lane.b32.xlu0 %v833, 20
        %v949 = vpop.permute.xlu0 %948
        %950 = vrot.lane.b32.xlu0 %v836, 20
        %v951 = vpop.permute.xlu0 %950
        %952 = vrot.lane.b32.xlu0 %v839, 20
        %v953 = vpop.permute.xlu0 %952
        %954 = vrot.lane.b32.xlu0 %v842, 20
        %v955 = vpop.permute.xlu0 %954
        %956 = vrot.lane.b32.xlu0 %v845, 20
        %v957 = vpop.permute.xlu0 %956
        %958 = vrot.lane.b32.xlu0 %v862, 20
        %v959 = vpop.permute.xlu0 %958
        %960 = vrot.lane.b32.xlu0 %v690, 24
        %v961 = vpop.permute.xlu0 %960
        %962 = vrot.lane.b32.xlu0 %v691, 24
        %v963 = vpop.permute.xlu0 %962
        %964 = vrot.lane.b32.xlu0 %v692, 24
        %v965 = vpop.permute.xlu0 %964
        %966 = vrot.lane.b32.xlu0 %v693, 24
        %v967 = vpop.permute.xlu0 %966
        %968 = vrot.lane.b32.xlu0 %v694, 24
        %v969 = vpop.permute.xlu0 %968
        %970 = vrot.lane.b32.xlu0 %v695, 24
        %v971 = vpop.permute.xlu0 %970
        %972 = vrot.lane.b32.xlu0 %v696, 24
        %v973 = vpop.permute.xlu0 %972
        %974 = vrot.lane.b32.xlu0 %v697, 24
        %v975 = vpop.permute.xlu0 %974
        %976 = vrot.lane.b32.xlu0 %v744, 28
        %v977 = vpop.permute.xlu0 %976
        %978 = vrot.lane.b32.xlu0 %v756, 28
        %v979 = vpop.permute.xlu0 %978
        %980 = vrot.lane.b32.xlu0 %v768, 28
        %v981 = vpop.permute.xlu0 %980
        %982 = vrot.lane.b32.xlu0 %v780, 28
        %v983 = vpop.permute.xlu0 %982
        %984 = vrot.lane.b32.xlu0 %v792, 28
        %v985 = vpop.permute.xlu0 %984
        %986 = vrot.lane.b32.xlu0 %v804, 28
        %v987 = vpop.permute.xlu0 %986
        %988 = vrot.lane.b32.xlu0 %v857, 28
        %v989 = vpop.permute.xlu0 %988
        %990 = vrot.lane.b32.xlu0 %v874, 28
        %v991 = vpop.permute.xlu0 %990
        %992 = vrot.lane.b32.xlu0 %v830, 32
        %v993 = vpop.permute.xlu0 %992
        %994 = vrot.lane.b32.xlu0 %v833, 32
        %v995 = vpop.permute.xlu0 %994
        %996 = vrot.lane.b32.xlu0 %v836, 32
        %v997 = vpop.permute.xlu0 %996
        %998 = vrot.lane.b32.xlu0 %v839, 32
        %v999 = vpop.permute.xlu0 %998
        %1000 = vrot.lane.b32.xlu0 %v842, 32
        %v1001 = vpop.permute.xlu0 %1000
        %1002 = vrot.lane.b32.xlu0 %v845, 32
        %v1003 = vpop.permute.xlu0 %1002
        %1004 = vrot.lane.b32.xlu0 %v862, 32
        %v1005 = vpop.permute.xlu0 %1004
        %1006 = vrot.lane.b32.xlu0 %v879, 32
        %v1007 = vpop.permute.xlu0 %1006
        %vm1008 = vcmask 31744
        %v1010 = vsel %vm1008, %v688, %v881
        %v1012 = vsel %vm1008, %v689, %v883
        %v1014 = vsel %vm1008, %v690, %v885
        %v1016 = vsel %vm1008, %v691, %v887
        %v1018 = vsel %vm1008, %v692, %v889
        %v1020 = vsel %vm1008, %v693, %v891
        %v1022 = vsel %vm1008, %v694, %v893
        %v1024 = vsel %vm1008, %v695, %v895
        %vm1025 = vcmask 64512
        %v1027 = vsel %vm1025, %v1010, %v897
        %v1029 = vsel %vm1025, %v1012, %v899
        %v1031 = vsel %vm1025, %v1014, %v901
        %v1033 = vsel %vm1025, %v1016, %v903
        %v1035 = vsel %vm1025, %v1018, %v905
        %v1037 = vsel %vm1025, %v1020, %v907
        %v1039 = vsel %vm1025, %v1022, %v909
        %v1041 = vsel %vm1025, %v1024, %v911
        %vm1042 = vcmask 97280
        %v1044 = vsel %vm1042, %v1027, %v913
        %v1046 = vsel %vm1042, %v1029, %v915
        %v1048 = vsel %vm1042, %v1031, %v917
        %v1050 = vsel %vm1042, %v1033, %v919
        %v1052 = vsel %vm1042, %v1035, %v921
        %v1054 = vsel %vm1042, %v1037, %v923
        %v1056 = vsel %vm1042, %v1039, %v925
        %v1058 = vsel %vm1042, %v1041, %v927
        %v1060 = vsel %vm341, %v1044, %v929
        %v1062 = vsel %vm341, %v1046, %v931
        %v1064 = vsel %vm341, %v1048, %v933
        %v1066 = vsel %vm341, %v1050, %v935
        %v1068 = vsel %vm341, %v1052, %v937
        %v1070 = vsel %vm341, %v1054, %v939
        %v1072 = vsel %vm341, %v1056, %v941
        %v1074 = vsel %vm341, %v1058, %v943
        %vm1075 = vcmask 162816
        %v1077 = vsel %vm1075, %v1060, %v945
        %v1079 = vsel %vm1075, %v1062, %v947
        %v1081 = vsel %vm1075, %v1064, %v949
        %v1083 = vsel %vm1075, %v1066, %v951
        %v1085 = vsel %vm1075, %v1068, %v953
        %v1087 = vsel %vm1075, %v1070, %v955
        %v1089 = vsel %vm1075, %v1072, %v957
        %v1091 = vsel %vm1075, %v1074, %v959
        %vm1092 = vcmask 195584
        %v1094 = vsel %vm1092, %v1077, %v961
        %v1096 = vsel %vm1092, %v1079, %v963
        %v1098 = vsel %vm1092, %v1081, %v965
        %v1100 = vsel %vm1092, %v1083, %v967
        %v1102 = vsel %vm1092, %v1085, %v969
        %v1104 = vsel %vm1092, %v1087, %v971
        %v1106 = vsel %vm1092, %v1089, %v973
        %v1108 = vsel %vm1092, %v1091, %v975
        %vm1109 = vcmask 228352
        %v1111 = vsel %vm1109, %v1094, %v977
        %v1113 = vsel %vm1109, %v1096, %v979
        %v1115 = vsel %vm1109, %v1098, %v981
        %v1117 = vsel %vm1109, %v1100, %v983
        %v1119 = vsel %vm1109, %v1102, %v985
        %v1121 = vsel %vm1109, %v1104, %v987
        %v1123 = vsel %vm1109, %v1106, %v989
        %v1125 = vsel %vm1109, %v1108, %v991
        %vm1126 = vcmask 261120
        %v1128 = vsel %vm1126, %v1111, %v993
        %v1130 = vsel %vm1126, %v1113, %v995
        %v1132 = vsel %vm1126, %v1115, %v997
        %v1134 = vsel %vm1126, %v1117, %v999
        %v1136 = vsel %vm1126, %v1119, %v1001
        %v1138 = vsel %vm1126, %v1121, %v1003
        %v1140 = vsel %vm1126, %v1123, %v1005
        %v1142 = vsel %vm1126, %v1125, %v1007
        %v1143 = vld [vmem:[%s3] sm:$0xf]
        %v1144 = vld [vmem:[%s3 + $0x4] sm:$0xf]
        %v1145 = vld [vmem:[%s3 + $0x8] sm:$0xf]
        %v1146 = vld [vmem:[%s3 + $0xc] sm:$0xf]
        %v1147 = vld [vmem:[%s3 + $0x10] sm:$0x3]
        %v1148 = vld [vmem:[%s4] sm:$0x1]
        %v1150 = vlaneseq
        %v1151 = vshrl.u32 %v1150, 7
        %v1152 = vsub.s32 0, %v1151
        %v1153 = vrot.slane %v1148, %v1152
        %v1160 = vunpack.c.l.b16 %v1143
        %v1161 = vunpack.c.l.b16 %v1144
        %v1162 = vunpack.c.l.b16 %v1145
        %v1163 = vunpack.c.l.b16 %v1146
        %v1164 = vunpack.c.l.b16 %v1147
        %v1165 = vpack.c.b16 %v1161, %v1160
        %v1166 = vpack.c.b16 %v1163, %v1162
        %v1167 = vpack.c.b16 %v1164, %v1164
        %vm1170 = vcmask 293888
        %v1171 = vsel %vm1170, %v1128, 0
        %v1173 = vsel %vm1170, %v1130, 0
        %v1175 = vsel %vm1170, %v1132, 0
        %v1177 = vsel %vm1170, %v1134, 0
        %v1179 = vsel %vm1170, %v1136, 0
        %v1181 = vsel %vm1170, %v1138, 0
        %v1183 = vsel %vm1170, %v1140, 0
        %v1185 = vsel %vm1170, %v1142, 0
        %vm1187 = vcmask 1041408
        %v1189 = vsel %vm1187, %v1167, 0
        %1191 = vmatprep.subr.bf16.mxu0 0
        %1192 = vmatpush1.bf16.msra.mxu0 0
        %1193 = vmatprep.subr.bf16.mxu0 0
        %1194 = vmatpush1.bf16.msra.mxu0 0
        %1195 = vmatprep.subr.bf16.mxu0 0
        %1196 = vmatpush1.bf16.msra.mxu0 0
        %1197 = vmatprep.subr.bf16.mxu0 0
        %1198 = vmatpush1.bf16.msra.mxu0 0
        %1199 = vmatprep.subr.bf16.mxu0 0
        %1200 = vmatpush1.bf16.msra.mxu0 0
        %1201 = vmatprep.subr.bf16.mxu0 0
        %1202 = vmatpush1.bf16.msra.mxu0 %v1189
        %1203 = vmatprep.subr.bf16.mxu0 0
        %1204 = vmatpush1.bf16.msra.mxu0 %v1166
        %1205 = vmatprep.subr.bf16.mxu0 0
        %1206 = vmatpush1.bf16.msra.mxu0 %v1165
        %1207 = vmatprep.subr.bf16.mxu0 0
        %1208 = vmatpush2.bf16.msra.mxu0 0
        %1209 = vmatprep.subr.bf16.mxu0 0
        %1210 = vmatpush2.bf16.msra.mxu0 0
        %1211 = vmatprep.subr.bf16.mxu0 0
        %1212 = vmatpush2.bf16.msra.mxu0 0
        %1213 = vmatprep.subr.bf16.mxu0 0
        %1214 = vmatpush2.bf16.msra.mxu0 0
        %1215 = vmatprep.subr.bf16.mxu0 0
        %1216 = vmatpush2.bf16.msra.mxu0 0
        %1217 = vmatprep.subr.bf16.mxu0 0
        %1218 = vmatpush2.bf16.msra.mxu0 0
        %1219 = vmatprep.subr.bf16.mxu0 0
        %1220 = vmatpush2.bf16.msra.mxu0 0
        %1221 = vmatprep.subr.bf16.mxu0 0
        %1222 = vmatpush2.bf16.msra.mxu0 0
        %1223 = vmatprep.mubr.bf16.mxu0 0
        %1224 = vmatmul.mubr.bf16.gmra.mxu0 %v1171
        %v1225 = vpop.f32.mrf.mxu0
        %v1226 = vadd.f32 %v1153, %v1225
        %v1227 = vpop.f32.mrf.mxu0
        %v1228 = vpop.f32.mrf.mxu0
        %v1229 = vadd.f32 %v1153, %v1228
        %v1230 = vpop.f32.mrf.mxu0
        %1231 = vmatprep.mubr.bf16.mxu0 0
        %1232 = vmatmul.mubr.bf16.gmra.mxu0 %v1173
        %v1233 = vpop.f32.mrf.mxu0
        %v1234 = vadd.f32 %v1153, %v1233
        %v1235 = vpop.f32.mrf.mxu0
        %v1236 = vpop.f32.mrf.mxu0
        %v1237 = vadd.f32 %v1153, %v1236
        %v1238 = vpop.f32.mrf.mxu0
        %1239 = vmatprep.mubr.bf16.mxu0 0
        %1240 = vmatmul.mubr.bf16.gmra.mxu0 %v1175
        %v1241 = vpop.f32.mrf.mxu0
        %v1242 = vadd.f32 %v1153, %v1241
        %v1243 = vpop.f32.mrf.mxu0
        %v1244 = vpop.f32.mrf.mxu0
        %v1245 = vadd.f32 %v1153, %v1244
        %v1246 = vpop.f32.mrf.mxu0
        %1247 = vmatprep.mubr.bf16.mxu0 0
        %1248 = vmatmul.mubr.bf16.gmra.mxu0 %v1177
        %v1249 = vpop.f32.mrf.mxu0
        %v1250 = vadd.f32 %v1153, %v1249
        %v1251 = vpop.f32.mrf.mxu0
        %v1252 = vpop.f32.mrf.mxu0
        %v1253 = vadd.f32 %v1153, %v1252
        %v1254 = vpop.f32.mrf.mxu0
        %1255 = vmatprep.mubr.bf16.mxu0 0
        %1256 = vmatmul.mubr.bf16.gmra.mxu0 %v1179
        %v1257 = vpop.f32.mrf.mxu0
        %v1258 = vadd.f32 %v1153, %v1257
        %v1259 = vpop.f32.mrf.mxu0
        %v1260 = vpop.f32.mrf.mxu0
        %v1261 = vadd.f32 %v1153, %v1260
        %v1262 = vpop.f32.mrf.mxu0
        %1263 = vmatprep.mubr.bf16.mxu0 0
        %1264 = vmatmul.mubr.bf16.gmra.mxu0 %v1181
        %v1265 = vpop.f32.mrf.mxu0
        %v1266 = vadd.f32 %v1153, %v1265
        %v1267 = vpop.f32.mrf.mxu0
        %v1268 = vpop.f32.mrf.mxu0
        %v1269 = vadd.f32 %v1153, %v1268
        %v1270 = vpop.f32.mrf.mxu0
        %1271 = vmatprep.mubr.bf16.mxu0 0
        %1272 = vmatmul.mubr.bf16.gmra.mxu0 %v1183
        %v1273 = vpop.f32.mrf.mxu0
        %v1274 = vadd.f32 %v1153, %v1273
        %v1275 = vpop.f32.mrf.mxu0
        %v1276 = vpop.f32.mrf.mxu0
        %v1277 = vadd.f32 %v1153, %v1276
        %v1278 = vpop.f32.mrf.mxu0
        %1279 = vmatprep.mubr.bf16.mxu0 0
        %1280 = vmatmul.mubr.bf16.gmra.mxu0 %v1185
        %v1281 = vpop.f32.mrf.mxu0
        %v1282 = vadd.f32 %v1153, %v1281
        %v1283 = vpop.f32.mrf.mxu0
        %v1284 = vpop.f32.mrf.mxu0
        %v1285 = vadd.f32 %v1153, %v1284
        %v1286 = vpop.f32.mrf.mxu0
        %1287 = vdwg.mxu0
        %v1288 = vmax.f32 %v1226, 0.0
        %v1289 = vmax.f32 %v1229, 0.0
        %v1290 = vmax.f32 %v1234, 0.0
        %v1291 = vmax.f32 %v1237, 0.0
        %v1292 = vmax.f32 %v1242, 0.0
        %v1293 = vmax.f32 %v1245, 0.0
        %v1294 = vmax.f32 %v1250, 0.0
        %v1295 = vmax.f32 %v1253, 0.0
        %v1296 = vmax.f32 %v1258, 0.0
        %v1297 = vmax.f32 %v1261, 0.0
        %v1298 = vmax.f32 %v1266, 0.0
        %v1299 = vmax.f32 %v1269, 0.0
        %v1300 = vmax.f32 %v1274, 0.0
        %v1301 = vmax.f32 %v1277, 0.0
        %v1302 = vmax.f32 %v1282, 0.0
        %v1303 = vmax.f32 %v1285, 0.0
        %v1304 = vpack.c.bf16 %v1289, %v1288
        %v1305 = vpack.c.bf16 %v1291, %v1290
        %v1306 = vpack.c.bf16 %v1293, %v1292
        %v1307 = vpack.c.bf16 %v1295, %v1294
        %v1308 = vpack.c.bf16 %v1297, %v1296
        %v1309 = vpack.c.bf16 %v1299, %v1298
        %v1310 = vpack.c.bf16 %v1301, %v1300
        %v1311 = vpack.c.bf16 %v1303, %v1302
        %v1312 = vld [vmem:[%s5] sm:$0x3]
        %v1313 = vld [vmem:[%s6] sm:$0x1]
        %v1315 = vlaneseq
        %v1316 = vshrl.u32 %v1315, 7
        %v1317 = vsub.s32 0, %v1316
        %v1318 = vrot.slane %v1313, %v1317
        %v1321 = vsel %vm1008, %v1304, 0
        %v1324 = vsel %vm1008, %v1305, 0
        %v1327 = vsel %vm1008, %v1306, 0
        %v1330 = vsel %vm1008, %v1307, 0
        %v1333 = vsel %vm1008, %v1308, 0
        %v1336 = vsel %vm1008, %v1309, 0
        %v1339 = vsel %vm1008, %v1310, 0
        %v1342 = vsel %vm1008, %v1311, 0
        %v1345 = vsel %vm1187, %v1312, 0
        %1347 = vmatprep.subr.bf16.mxu0 0
        %1348 = vmatpush1.bf16.msra.mxu0 0
        %1349 = vmatprep.subr.bf16.mxu0 0
        %1350 = vmatpush1.bf16.msra.mxu0 0
        %1351 = vmatprep.subr.bf16.mxu0 0
        %1352 = vmatpush1.bf16.msra.mxu0 0
        %1353 = vmatprep.subr.bf16.mxu0 0
        %1354 = vmatpush1.bf16.msra.mxu0 0
        %1355 = vmatprep.subr.bf16.mxu0 0
        %1356 = vmatpush1.bf16.msra.mxu0 0
        %1357 = vmatprep.subr.bf16.mxu0 0
        %1358 = vmatpush1.bf16.msra.mxu0 0
        %1359 = vmatprep.subr.bf16.mxu0 0
        %1360 = vmatpush1.bf16.msra.mxu0 0
        %1361 = vmatprep.subr.bf16.mxu0 0
        %1362 = vmatpush1.bf16.msra.mxu0 %v1345
        %1363 = vmatprep.subr.bf16.mxu0 0
        %1364 = vmatpush2.bf16.msra.mxu0 0
        %1365 = vmatprep.subr.bf16.mxu0 0
        %1366 = vmatpush2.bf16.msra.mxu0 0
        %1367 = vmatprep.subr.bf16.mxu0 0
        %1368 = vmatpush2.bf16.msra.mxu0 0
        %1369 = vmatprep.subr.bf16.mxu0 0
        %1370 = vmatpush2.bf16.msra.mxu0 0
        %1371 = vmatprep.subr.bf16.mxu0 0
        %1372 = vmatpush2.bf16.msra.mxu0 0
        %1373 = vmatprep.subr.bf16.mxu0 0
        %1374 = vmatpush2.bf16.msra.mxu0 0
        %1375 = vmatprep.subr.bf16.mxu0 0
        %1376 = vmatpush2.bf16.msra.mxu0 0
        %1377 = vmatprep.subr.bf16.mxu0 0
        %1378 = vmatpush2.bf16.msra.mxu0 0
        %1379 = vmatprep.mubr.bf16.mxu0 0
        %1380 = vmatmul.mubr.bf16.gmra.mxu0 %v1321
        %v1381 = vpop.f32.mrf.mxu0
        %v1382 = vadd.f32 %v1318, %v1381
        %v1383 = vpop.f32.mrf.mxu0
        %v1384 = vpop.f32.mrf.mxu0
        %v1385 = vadd.f32 %v1318, %v1384
        %v1386 = vpop.f32.mrf.mxu0
        %1387 = vmatprep.mubr.bf16.mxu0 0
        %1388 = vmatmul.mubr.bf16.gmra.mxu0 %v1324
        %v1389 = vpop.f32.mrf.mxu0
        %v1390 = vadd.f32 %v1318, %v1389
        %v1391 = vpop.f32.mrf.mxu0
        %v1392 = vpop.f32.mrf.mxu0
        %v1393 = vadd.f32 %v1318, %v1392
        %v1394 = vpop.f32.mrf.mxu0
        %1395 = vmatprep.mubr.bf16.mxu0 0
        %1396 = vmatmul.mubr.bf16.gmra.mxu0 %v1327
        %v1397 = vpop.f32.mrf.mxu0
        %v1398 = vadd.f32 %v1318, %v1397
        %v1399 = vpop.f32.mrf.mxu0
        %v1400 = vpop.f32.mrf.mxu0
        %v1401 = vadd.f32 %v1318, %v1400
        %v1402 = vpop.f32.mrf.mxu0
        %1403 = vmatprep.mubr.bf16.mxu0 0
        %1404 = vmatmul.mubr.bf16.gmra.mxu0 %v1330
        %v1405 = vpop.f32.mrf.mxu0
        %v1406 = vadd.f32 %v1318, %v1405
        %v1407 = vpop.f32.mrf.mxu0
        %v1408 = vpop.f32.mrf.mxu0
        %v1409 = vadd.f32 %v1318, %v1408
        %v1410 = vpop.f32.mrf.mxu0
        %1411 = vmatprep.mubr.bf16.mxu0 0
        %1412 = vmatmul.mubr.bf16.gmra.mxu0 %v1333
        %v1413 = vpop.f32.mrf.mxu0
        %v1414 = vadd.f32 %v1318, %v1413
        %v1415 = vpop.f32.mrf.mxu0
        %v1416 = vpop.f32.mrf.mxu0
        %v1417 = vadd.f32 %v1318, %v1416
        %v1418 = vpop.f32.mrf.mxu0
        %1419 = vmatprep.mubr.bf16.mxu0 0
        %1420 = vmatmul.mubr.bf16.gmra.mxu0 %v1336
        %v1421 = vpop.f32.mrf.mxu0
        %v1422 = vadd.f32 %v1318, %v1421
        %v1423 = vpop.f32.mrf.mxu0
        %v1424 = vpop.f32.mrf.mxu0
        %v1425 = vadd.f32 %v1318, %v1424
        %v1426 = vpop.f32.mrf.mxu0
        %1427 = vmatprep.mubr.bf16.mxu0 0
        %1428 = vmatmul.mubr.bf16.gmra.mxu0 %v1339
        %v1429 = vpop.f32.mrf.mxu0
        %v1430 = vadd.f32 %v1318, %v1429
        %v1431 = vpop.f32.mrf.mxu0
        %v1432 = vpop.f32.mrf.mxu0
        %v1433 = vadd.f32 %v1318, %v1432
        %v1434 = vpop.f32.mrf.mxu0
        %1435 = vmatprep.mubr.bf16.mxu0 0
        %1436 = vmatmul.mubr.bf16.gmra.mxu0 %v1342
        %v1437 = vpop.f32.mrf.mxu0
        %v1438 = vadd.f32 %v1318, %v1437
        %v1439 = vpop.f32.mrf.mxu0
        %v1440 = vpop.f32.mrf.mxu0
        %v1441 = vadd.f32 %v1318, %v1440
        %v1442 = vpop.f32.mrf.mxu0
        %1443 = vdwg.mxu0
        %s1444 = sadd.s32 %s293, 1
        %s1445 = smul.u32 %s1444, 16
        %s1446 = scalar_lea.vmem %s290, %s1445
        %v1447 = vld [vmem:[%s1446] sm:$0xff]
        %v1448 = vld [vmem:[%s1446 + $0x8] sm:$0xff]
        %v1449 = vld [vmem:[%s1446 + $0x10] sm:$0xff]
        %v1450 = vld [vmem:[%s1446 + $0x18] sm:$0xff]
        %v1451 = vld [vmem:[%s1446 + $0x20] sm:$0xff]
        %v1452 = vld [vmem:[%s1446 + $0x28] sm:$0xff]
        %v1453 = vld [vmem:[%s1446 + $0x30] sm:$0xff]
        %v1454 = vld [vmem:[%s1446 + $0x38] sm:$0xff]
        %v1455 = vld [vmem:[%s1446 + $0x40] sm:$0xff]
        %v1456 = vld [vmem:[%s1446 + $0x48] sm:$0xff]
        %v1457 = vld [vmem:[%s1446 + $0x50] sm:$0xff]
        %v1458 = vld [vmem:[%s1446 + $0x58] sm:$0xff]
        %v1459 = vld [vmem:[%s1446 + $0x60] sm:$0xff]
        %v1460 = vld [vmem:[%s1446 + $0x68] sm:$0xff]
        %v1461 = vld [vmem:[%s1446 + $0x70] sm:$0xff]
        %v1462 = vld [vmem:[%s1446 + $0x78] sm:$0xff]
        %v1463 = vadd.f32 %v1382, %v1447
        %v1464 = vadd.f32 %v1385, %v1448
        %v1465 = vadd.f32 %v1390, %v1449
        %v1466 = vadd.f32 %v1393, %v1450
        %v1467 = vadd.f32 %v1398, %v1451
        %v1468 = vadd.f32 %v1401, %v1452
        %v1469 = vadd.f32 %v1406, %v1453
        %v1470 = vadd.f32 %v1409, %v1454
        %v1471 = vadd.f32 %v1414, %v1455
        %v1472 = vadd.f32 %v1417, %v1456
        %v1473 = vadd.f32 %v1422, %v1457
        %v1474 = vadd.f32 %v1425, %v1458
        %v1475 = vadd.f32 %v1430, %v1459
        %v1476 = vadd.f32 %v1433, %v1460
        %v1477 = vadd.f32 %v1438, %v1461
        %v1478 = vadd.f32 %v1441, %v1462
        %v1479 = vmax.f32 %v1463, 0.0
        %v1480 = vmax.f32 %v1464, 0.0
        %v1481 = vmax.f32 %v1465, 0.0
        %v1482 = vmax.f32 %v1466, 0.0
        %v1483 = vmax.f32 %v1467, 0.0
        %v1484 = vmax.f32 %v1468, 0.0
        %v1485 = vmax.f32 %v1469, 0.0
        %v1486 = vmax.f32 %v1470, 0.0
        %v1487 = vmax.f32 %v1471, 0.0
        %v1488 = vmax.f32 %v1472, 0.0
        %v1489 = vmax.f32 %v1473, 0.0
        %v1490 = vmax.f32 %v1474, 0.0
        %v1491 = vmax.f32 %v1475, 0.0
        %v1492 = vmax.f32 %v1476, 0.0
        %v1493 = vmax.f32 %v1477, 0.0
        %v1494 = vmax.f32 %v1478, 0.0
        %1495 = vst.msk [vmem:[%s285] sm:$0xff] %vm341, %v1479
        %1496 = vst.msk [vmem:[%s285 + $0x8] sm:$0xff] %vm341, %v1480
        %1497 = vst.msk [vmem:[%s285 + $0x10] sm:$0xff] %vm341, %v1481
        %1498 = vst.msk [vmem:[%s285 + $0x18] sm:$0xff] %vm341, %v1482
        %1499 = vst.msk [vmem:[%s285 + $0x20] sm:$0xff] %vm341, %v1483
        %1500 = vst.msk [vmem:[%s285 + $0x28] sm:$0xff] %vm341, %v1484
        %1501 = vst.msk [vmem:[%s285 + $0x30] sm:$0xff] %vm341, %v1485
        %1502 = vst.msk [vmem:[%s285 + $0x38] sm:$0xff] %vm341, %v1486
        %1503 = vst.msk [vmem:[%s285 + $0x40] sm:$0xff] %vm341, %v1487
        %1504 = vst.msk [vmem:[%s285 + $0x48] sm:$0xff] %vm341, %v1488
        %1505 = vst.msk [vmem:[%s285 + $0x50] sm:$0xff] %vm341, %v1489
        %1506 = vst.msk [vmem:[%s285 + $0x58] sm:$0xff] %vm341, %v1490
        %1507 = vst.msk [vmem:[%s285 + $0x60] sm:$0xff] %vm341, %v1491
        %1508 = vst.msk [vmem:[%s285 + $0x68] sm:$0xff] %vm341, %v1492
        %1509 = vst.msk [vmem:[%s285 + $0x70] sm:$0xff] %vm341, %v1493
        %1510 = vst.msk [vmem:[%s285 + $0x78] sm:$0xff] %vm341, %v1494
        %s1511 = sand.u32 %s195, 1
        %s1512 = scalar_lea.sflag [#allocation3], %s1511
        %s1513 = sand.u32 %s195, 1
        %s1514 = smul.addr %s1513, 128
        %s1515 = scalar_lea.vmem [#allocation2], %s1514
        // Predicated region
        $region49: #{tpu_custom_call.1} parent=47 // pred_check
          %p1516 = pneg %p205
        $region50: #{tpu_custom_call.1} parent=47 // pred_check_branch
          %1518 = sbr.rel (%p1516) target = $region52
        $region51: #{tpu_custom_call.1} parent=47 // pred_region
          %s1519 = smul.u32 8, %s26
          %s1521 = ssub.s32 2048, 2048
          %1522 = vsyncadd %s1512, %s1521
          %s1523 = smul.addr %s1519, 2
          %s1524 = smul.addr %s25, 32
          %s1525 = sadd.s32 %s1523, %s1524
          %s1526 = smul.addr %s1525, 128
          %s1527 = scalar_lea.hbm %s7, %s1526
          %s1528 = sshll.u32 %s1515, 4
          %s1529 = int_to_ptr.vmem [resolvable:$true] %s1528
          %1534 = dma.vmem_to_hbm [thread:$0]  %s1529, 2048, %s1527, %s1512, 128, 128, 8
        $region52: #{tpu_custom_call.1} parent=47 // pred_fallthru
          _
      $region48: #{tpu_custom_call.1} parent=5 // pred_fallthru
        _
      %p1535 = scmp.le.s32.totalorder 2, %s16
      // Predicated region
      $region53: #{tpu_custom_call.1} parent=5 // pred_check
        %p1536 = pneg %p1535
      $region54: #{tpu_custom_call.1} parent=5 // pred_check_branch
        %1538 = sbr.rel (%p1536) target = $region56
      $region55: #{tpu_custom_call.1} parent=5 // pred_region
        %s1539 = ssub.s32 %s16, 2
        // Predicated region
        $region57: #{tpu_custom_call.1} parent=55 // pred_check
          %p1540 = pneg %p211
        $region58: #{tpu_custom_call.1} parent=55 // pred_check_branch
          %1542 = sbr.rel (%p1540) target = $region60
        $region59: #{tpu_custom_call.1} parent=55 // pred_region
          %s1543 = sand.u32 %s196, 1
          %s1544 = scalar_lea.sflag [#allocation3], %s1543
          %s1545 = sand.u32 %s196, 1
          %s1546 = smul.addr %s1545, 128
          %s1547 = scalar_lea.vmem [#allocation2], %s1546
          %1548 = dma.done %s1544, 2048
        $region60: #{tpu_custom_call.1} parent=55 // pred_fallthru
          _
      $region56: #{tpu_custom_call.1} parent=5 // pred_fallthru
        _
    $region6: #{tpu_custom_call.1} parent=1 // loop_footer
      %s20 = sadd.s32 1, %s16
    $region7: #{tpu_custom_call.1} parent=1 // loop_footer_branch
      %15 = sbr.rel target = $region3
    $region8: #{tpu_custom_call.1} parent=1 // loop_exit
      _
    %1549 = vsyncpa [#allocation3], 1
    %s1550 = scalar_lea.sflag [#allocation3], 1
    %1551 = vsyncpa %s1550, 1

</llo_original>
